<compile_context>
chip_gen: v6e
topology: v6e:2x2x1
jax: 0.10.0
libtpu: 0.0.40
codegen_flags: <defaults>
</compile_context>

<pallas_src>
import functools

import jax
import jax.numpy as jnp
from jax import lax
from jax.experimental import pallas as pl
from jax.experimental.pallas import tpu as pltpu


# ----------------------------------------------------------------------------
# Fused matmul (+ shift [+ relu]) Pallas kernels
# ----------------------------------------------------------------------------

_MAX_SINGLE_K = 4096   # largest K handled as one full-extent block (covers net)


def _round_up(x, m):
    return (x + m - 1) // m * m


def _mm_epilogue_kernel(a_ref, b_ref, shift_ref, o_ref, *, relu):
    """Single-K-block matmul: o = maybe_relu(a @ b + shift).

    a/b are bf16, accumulation and epilogue are f32 (v5e-safe), o is bf16/f32.
    """
    r = jnp.dot(a_ref[...], b_ref[...], preferred_element_type=jnp.float32)
    r = r + shift_ref[...]
    if relu:
        r = jnp.maximum(r, 0.0)
    o_ref[...] = r.astype(o_ref.dtype)


def _mm_epilogue_masked_kernel(a_ref, b_ref, shift_ref, mask_ref, o_ref):
    """Like above but ReLU is applied per-column (mask>0.5 => relu, else linear).

    Used by the fused Inception heads that carry an avg_pool branch whose
    activation must happen after the (commuted) pooling.
    """
    r = jnp.dot(a_ref[...], b_ref[...], preferred_element_type=jnp.float32)
    r = r + shift_ref[...]
    r = jnp.where(mask_ref[...] > 0.5, jnp.maximum(r, 0.0), r)
    o_ref[...] = r.astype(o_ref.dtype)


def _mm_epilogue_acc_kernel(a_ref, b_ref, shift_ref, o_ref, acc_ref, *, relu):
    """K-tiled matmul with f32 VMEM accumulator (fallback for very large K;
    never hit by this network)."""
    k = pl.program_id(2)

    @pl.when(k == 0)
    def _():
        acc_ref[...] = jnp.zeros_like(acc_ref)

    acc_ref[...] += jnp.dot(a_ref[...], b_ref[...],
                            preferred_element_type=jnp.float32)

    @pl.when(k == pl.num_programs(2) - 1)
    def _():
        r = acc_ref[...] + shift_ref[...]
        if relu:
            r = jnp.maximum(r, 0.0)
        o_ref[...] = r.astype(o_ref.dtype)


def _choose_tiles(M, Kp, Np):
    """Tile selection.

    * K: one full-extent block (no k grid axis / no accumulator round-trip)
      for every layer of this network; K-tiled fallback above 4096.
    * N: lane-dense (multiple of 128).  For Np >= 256 split into >= 2 blocks:
      on v7x both TCs get disjoint weight columns (no weight re-read), and on
      every chip the next block's weight DMA overlaps the current MXU work.
    * M: single block -> the weight matrix is DMA'd exactly once per layer
      (the old 2-way M split doubled weight HBM traffic).  Only very large M
      (batch > 1 reuse) is tiled, to bound VMEM.
    """
    TK = Kp if Kp <= _MAX_SINGLE_K else 1024

    if Np <= 128:
        TN = Np
    else:
        n_lanes = Np // 128
        TN = 128
        for nblocks in range(2, n_lanes + 1):      # smallest block count >= 2
            if n_lanes % nblocks == 0:
                TN = (n_lanes // nblocks) * 128
                break

    Mp = _round_up(M, 16)
    if Mp > 2048:
        TM = 1024
        Mp = _round_up(M, TM)
    else:
        TM = Mp
    return Mp, TM, TK, TN


def _vmem_limit_bytes(TM, TK, TN):
    """Per-call scoped-VMEM limit from actual block sizes (+ headroom).

    Keeps well under v7x's 64 MiB while never starving the pipeline."""
    blocks = TM * TK * 2 + TK * TN * 2 + 2 * TN * 4 + TM * TN * 4
    need = 2 * blocks + TM * TN * 4            # double-buffering + f32 scratch
    return int(min(64 * 1024 * 1024, max(16 * 1024 * 1024, 2 * need)))


def prep_matmul(w_mat, shift):
    """Pre-pad / cast the static weights once at init.

    w_mat: [K, N] float32 (BN scale already folded in), shift: [N] float32.
    Returns (w_padded bf16 [Kp, Np], shift_padded f32 [1, Np]).
    K is padded to a multiple of 128 so both the A and W tiles feeding the MXU
    are lane-dense (no masked vector loads); padded rows/cols are zero.
    """
    K, N = w_mat.shape
    Np = _round_up(N, 128)
    if K <= _MAX_SINGLE_K:
        Kp = _round_up(K, 128)
    else:
        Kp = _round_up(K, 1024)                  # K-tiled fallback
    w_p = jnp.pad(w_mat.astype(jnp.float32),
                  ((0, Kp - K), (0, Np - N))).astype(jnp.bfloat16)
    sh_p = jnp.pad(shift.reshape(1, -1).astype(jnp.float32),
                   ((0, 0), (0, Np - N)))
    return w_p, sh_p


@functools.partial(jax.jit, static_argnames=("n_valid", "relu", "out_dtype"))
def fused_matmul(a, w_p, sh_p, mask_p=None, *, n_valid, relu, out_dtype):
    """maybe_relu(a @ w_p + sh_p)[:M, :n_valid] via one fused Pallas kernel.

    If `mask_p` (f32 [1, Np]) is given, ReLU is applied per-column where the
    mask is 1 and skipped where it is 0 (pool-branch columns of fused heads).
    """
    M, K = a.shape
    Kp, Np = w_p.shape
    Mp, TM, TK, TN = _choose_tiles(M, Kp, Np)
    vmem = _vmem_limit_bytes(TM, TK, TN)

    a_p = a if a.dtype == jnp.bfloat16 else a.astype(jnp.bfloat16)
    if Mp != M or Kp != K:
        a_p = jnp.pad(a_p, ((0, Mp - M), (0, Kp - K)))

    grid = (Mp // TM, Np // TN)

    if TK == Kp:
        # Single K block: no k grid axis, no accumulator scratch.
        if mask_p is None:
            kernel = functools.partial(_mm_epilogue_kernel, relu=relu)
            in_specs = [
                pl.BlockSpec((TM, TK), lambda i, j: (i, 0)),
                pl.BlockSpec((TK, TN), lambda i, j: (0, j)),
                pl.BlockSpec((1, TN), lambda i, j: (0, j)),
            ]
            args = (a_p, w_p, sh_p)
        else:
            kernel = _mm_epilogue_masked_kernel
            in_specs = [
                pl.BlockSpec((TM, TK), lambda i, j: (i, 0)),
                pl.BlockSpec((TK, TN), lambda i, j: (0, j)),
                pl.BlockSpec((1, TN), lambda i, j: (0, j)),
                pl.BlockSpec((1, TN), lambda i, j: (0, j)),
            ]
            args = (a_p, w_p, sh_p, mask_p)
        out = pl.pallas_call(
            kernel,
            out_shape=jax.ShapeDtypeStruct((Mp, Np), out_dtype),
            grid_spec=pltpu.PrefetchScalarGridSpec(
                num_scalar_prefetch=0,
                grid=grid,
                in_specs=in_specs,
                out_specs=pl.BlockSpec((TM, TN), lambda i, j: (i, j)),
            ),
            compiler_params=pltpu.CompilerParams(
                dimension_semantics=("parallel", "parallel"),
                vmem_limit_bytes=vmem),
        )(*args)
    else:
        assert mask_p is None, "masked epilogue only supported on single-K path"
        out = pl.pallas_call(
            functools.partial(_mm_epilogue_acc_kernel, relu=relu),
            out_shape=jax.ShapeDtypeStruct((Mp, Np), out_dtype),
            grid_spec=pltpu.PrefetchScalarGridSpec(
                num_scalar_prefetch=0,
                grid=(Mp // TM, Np // TN, Kp // TK),
                in_specs=[
                    pl.BlockSpec((TM, TK), lambda i, j, k: (i, k)),
                    pl.BlockSpec((TK, TN), lambda i, j, k: (k, j)),
                    pl.BlockSpec((1, TN), lambda i, j, k: (0, j)),
                ],
                out_specs=pl.BlockSpec((TM, TN), lambda i, j, k: (i, j)),
                scratch_shapes=[pltpu.VMEM((TM, TN), jnp.float32)],
            ),
            compiler_params=pltpu.CompilerParams(
                dimension_semantics=("parallel", "parallel", "arbitrary"),
                vmem_limit_bytes=vmem),
        )(a_p, w_p, sh_p)

    if Mp != M or Np != n_valid:
        out = out[:M, :n_valid]
    return out


# ----------------------------------------------------------------------------
# Conv (im2col) glue and pooling glue
# ----------------------------------------------------------------------------

def _pair(v):
    return (v, v) if isinstance(v, int) else tuple(v)


def _im2col(x, kh, kw, stride, padding):
    """x NHWC -> patch matrix [B*Ho*Wo, kh*kw*C] (column order (i, j, c))."""
    B, H, W, C = x.shape
    sh, sw = stride
    ph, pw = padding
    Ho = (H + 2 * ph - kh) // sh + 1
    Wo = (W + 2 * pw - kw) // sw + 1
    if kh == 1 and kw == 1 and sh == 1 and sw == 1 and ph == 0 and pw == 0:
        return x.reshape(B * H * W, C), Ho, Wo
    xp = jnp.pad(x, ((0, 0), (ph, ph), (pw, pw), (0, 0)))
    # TODO(synk): the kh*kw tap expansion is still materialized in HBM (bf16);
    # moving the tap loop in-kernel (full-extent padded activation in VMEM +
    # pl.ds-shifted reads into the f32 accumulator) would remove this copy and
    # enable fusing whole per-branch conv chains into one pallas_call.
    parts = []
    for i in range(kh):
        for j in range(kw):
            parts.append(
                xp[:, i:i + (Ho - 1) * sh + 1:sh, j:j + (Wo - 1) * sw + 1:sw, :])
    a = jnp.concatenate(parts, axis=-1).reshape(B * Ho * Wo, kh * kw * C)
    return a, Ho, Wo


def max_pool_3x3_s2(x):
    # TODO(synk): max-pool kept as lax.reduce_window glue; the conv/matmul/BN/
    # ReLU hot path is in the Pallas kernel.
    neg_inf = jnp.array(-jnp.inf, dtype=x.dtype)
    return lax.reduce_window(x, neg_inf, lax.max,
                             (1, 3, 3, 1), (1, 2, 2, 1), "VALID")


def avg_pool_3x3_s1_p1(x):
    # PyTorch avg_pool2d(count_include_pad=True): divide by 9 everywhere.
    s = lax.reduce_window(x.astype(jnp.float32), 0.0, lax.add,
                          (1, 3, 3, 1), (1, 1, 1, 1),
                          ((0, 0), (1, 1), (1, 1), (0, 0)))
    return s / 9.0


def _avg_pool_then_act(bp_lin, shift):
    """Finish the fused pool branch: avg_pool(3,1,1) was commuted to AFTER the
    1x1 matmul; pool the small pre-activation output, then + shift, ReLU."""
    p = avg_pool_3x3_s1_p1(bp_lin)
    return jnp.maximum(p + shift, 0.0).astype(jnp.bfloat16)


# ----------------------------------------------------------------------------
# Modules (deterministic truncated-normal init like the PyTorch module)
# ----------------------------------------------------------------------------

def _trunc_normal(key, shape, stddev=0.1):
    return jax.random.truncated_normal(key, -2.0, 2.0, shape, jnp.float32) * stddev


class BasicConv2d:
    """Conv2d(bias=False) + BatchNorm2d(eps=1e-3, eval) + ReLU as one fused
    Pallas matmul.  BN scale folded into the weight matrix, weights pre-padded
    and cast to bf16 once at init."""

    def __init__(self, key, in_c, out_c, kernel_size, stride=1, padding=0,
                 prepare=True):
        kh, kw = _pair(kernel_size)
        self.kh, self.kw = kh, kw
        self.stride = _pair(stride)
        self.padding = _pair(padding)
        self.out_c = out_c
        w = _trunc_normal(key, (kh, kw, in_c, out_c), stddev=0.1)
        # BatchNorm2d(eps=1e-3) in eval mode: gamma=1, beta=0, mean=0, var=1.
        eps = 1e-3
        gamma = jnp.ones((out_c,), jnp.float32)
        beta = jnp.zeros((out_c,), jnp.float32)
        mean = jnp.zeros((out_c,), jnp.float32)
        var = jnp.ones((out_c,), jnp.float32)
        scale = gamma / jnp.sqrt(var + eps)
        self.shift = beta - mean * scale
        # Fold BN scale into the [kh*kw*Cin, Cout] matmul weight.
        self.w_mat = w.reshape(kh * kw * in_c, out_c) * scale[None, :]
        if prepare:
            self.w_p, self.sh_p = prep_matmul(self.w_mat, self.shift)

    def __call__(self, x):
        B = x.shape[0]
        a, Ho, Wo = _im2col(x.astype(jnp.bfloat16), self.kh, self.kw,
                            self.stride, self.padding)
        out = fused_matmul(a, self.w_p, self.sh_p, n_valid=self.out_c,
                           relu=True, out_dtype=jnp.bfloat16)
        return out.reshape(B, Ho, Wo, self.out_c)


class Fused1x1:
    """Sibling 1x1/stride-1 convs sharing the same input, fused into one wide
    matmul (single activation read, single launch, lane-dense N).

    `pool_tail` (if given) is the avg_pool->1x1 branch_pool conv; its columns
    are appended to the fused weight but skip the in-kernel ReLU/shift, since
    pooling (linear) is commuted to after the matmul and shift+ReLU follow the
    pooling.  This removes a full-width activation read and a pallas_call per
    Inception block with no extra weight bytes."""

    def __init__(self, convs, pool_tail=None):
        self.sizes = [c.out_c for c in convs]
        mats = [c.w_mat for c in convs]
        shifts = [c.shift for c in convs]
        relu_cols = [jnp.ones((c.out_c,), jnp.float32) for c in convs]
        self.pool_tail = pool_tail
        if pool_tail is not None:
            self.sizes.append(pool_tail.out_c)
            mats.append(pool_tail.w_mat)
            shifts.append(jnp.zeros((pool_tail.out_c,), jnp.float32))
            relu_cols.append(jnp.zeros((pool_tail.out_c,), jnp.float32))
        self.n = int(sum(self.sizes))
        w = jnp.concatenate(mats, axis=1)
        sh = jnp.concatenate(shifts, axis=0)
        self.w_p, self.sh_p = prep_matmul(w, sh)
        if pool_tail is not None:
            mask = jnp.concatenate(relu_cols, axis=0).reshape(1, -1)
            _, Np = self.w_p.shape
            self.mask_p = jnp.pad(mask, ((0, 0), (0, Np - self.n)))
        else:
            self.mask_p = None

    def __call__(self, x):
        B, H, W, C = x.shape
        a = x.astype(jnp.bfloat16).reshape(B * H * W, C)
        out = fused_matmul(a, self.w_p, self.sh_p, self.mask_p,
                           n_valid=self.n, relu=True, out_dtype=jnp.bfloat16)
        out = out.reshape(B, H, W, self.n)
        # TODO(synk): branch slice offsets are not 128-aligned (e.g. 64/112);
        # padding each branch width to a lane multiple inside the fused weight
        # would keep downstream reads lane-dense with no relayout copies.
        parts, s = [], 0
        for n in self.sizes:
            parts.append(out[..., s:s + n])
            s += n
        return parts


class InceptionA:
    def __init__(self, keys, in_channels, pool_features):
        self.branch1x1 = BasicConv2d(next(keys), in_channels, 64, 1)
        self.branch5x5_1 = BasicConv2d(next(keys), in_channels, 48, 1)
        self.branch5x5_2 = BasicConv2d(next(keys), 48, 64, 5, padding=2)
        self.branch3x3dbl_1 = BasicConv2d(next(keys), in_channels, 64, 1)
        self.branch3x3dbl_2 = BasicConv2d(next(keys), 64, 96, 3, padding=1)
        self.branch3x3dbl_3 = BasicConv2d(next(keys), 96, 96, 3, padding=1)
        self.branch_pool = BasicConv2d(next(keys), in_channels, pool_features, 1,
                                       prepare=False)
        self.head = Fused1x1([self.branch1x1, self.branch5x5_1,
                              self.branch3x3dbl_1], pool_tail=self.branch_pool)

    def __call__(self, x):
        b1, b5, b3, bp = self.head(x)
        b5 = self.branch5x5_2(b5)
        b3 = self.branch3x3dbl_3(self.branch3x3dbl_2(b3))
        bp = _avg_pool_then_act(bp, self.branch_pool.shift)
        return jnp.concatenate([b1, b5, b3, bp], axis=-1)


class InceptionB:
    def __init__(self, keys, in_channels):
        self.branch3x3 = BasicConv2d(next(keys), in_channels, 384, 3, stride=2)
        self.branch3x3dbl_1 = BasicConv2d(next(keys), in_channels, 64, 1)
        self.branch3x3dbl_2 = BasicConv2d(next(keys), 64, 96, 3, padding=1)
        self.branch3x3dbl_3 = BasicConv2d(next(keys), 96, 96, 3, stride=2)

    def __call__(self, x):
        b3 = self.branch3x3(x)
        bd = self.branch3x3dbl_3(self.branch3x3dbl_2(self.branch3x3dbl_1(x)))
        bp = max_pool_3x3_s2(x)
        return jnp.concatenate([b3, bd, bp], axis=-1)


class InceptionC:
    def __init__(self, keys, in_channels, channels_7x7):
        c7 = channels_7x7
        self.branch1x1 = BasicConv2d(next(keys), in_channels, 192, 1)
        self.branch7x7_1 = BasicConv2d(next(keys), in_channels, c7, 1)
        self.branch7x7_2 = BasicConv2d(next(keys), c7, c7, (1, 7), padding=(0, 3))
        self.branch7x7_3 = BasicConv2d(next(keys), c7, 192, (7, 1), padding=(3, 0))
        self.branch7x7dbl_1 = BasicConv2d(next(keys), in_channels, c7, 1)
        self.branch7x7dbl_2 = BasicConv2d(next(keys), c7, c7, (7, 1), padding=(3, 0))
        self.branch7x7dbl_3 = BasicConv2d(next(keys), c7, c7, (1, 7), padding=(0, 3))
        self.branch7x7dbl_4 = BasicConv2d(next(keys), c7, c7, (7, 1), padding=(3, 0))
        self.branch7x7dbl_5 = BasicConv2d(next(keys), c7, 192, (1, 7), padding=(0, 3))
        self.branch_pool = BasicConv2d(next(keys), in_channels, 192, 1,
                                       prepare=False)
        self.head = Fused1x1([self.branch1x1, self.branch7x7_1,
                              self.branch7x7dbl_1], pool_tail=self.branch_pool)

    def __call__(self, x):
        # TODO(synk): the 1x7/7x1 chains could be fused into one pallas_call
        # holding the tiny intermediate in VMEM, cutting launch count further.
        b1, b7, bd, bp = self.head(x)
        b7 = self.branch7x7_3(self.branch7x7_2(b7))
        bd = self.branch7x7dbl_2(bd)
        bd = self.branch7x7dbl_3(bd)
        bd = self.branch7x7dbl_4(bd)
        bd = self.branch7x7dbl_5(bd)
        bp = _avg_pool_then_act(bp, self.branch_pool.shift)
        return jnp.concatenate([b1, b7, bd, bp], axis=-1)


class InceptionD:
    def __init__(self, keys, in_channels):
        self.branch3x3_1 = BasicConv2d(next(keys), in_channels, 192, 1)
        self.branch3x3_2 = BasicConv2d(next(keys), 192, 320, 3, stride=2)
        self.branch7x7x3_1 = BasicConv2d(next(keys), in_channels, 192, 1)
        self.branch7x7x3_2 = BasicConv2d(next(keys), 192, 192, (1, 7), padding=(0, 3))
        self.branch7x7x3_3 = BasicConv2d(next(keys), 192, 192, (7, 1), padding=(3, 0))
        self.branch7x7x3_4 = BasicConv2d(next(keys), 192, 192, 3, stride=2)
        self.head = Fused1x1([self.branch3x3_1, self.branch7x7x3_1])

    def __call__(self, x):
        b3, b7 = self.head(x)
        b3 = self.branch3x3_2(b3)
        b7 = self.branch7x7x3_4(self.branch7x7x3_3(self.branch7x7x3_2(b7)))
        bp = max_pool_3x3_s2(x)
        return jnp.concatenate([b3, b7, bp], axis=-1)


class InceptionE:
    def __init__(self, keys, in_channels):
        self.branch1x1 = BasicConv2d(next(keys), in_channels, 320, 1)
        self.branch3x3_1 = BasicConv2d(next(keys), in_channels, 384, 1)
        self.branch3x3_2a = BasicConv2d(next(keys), 384, 384, (1, 3), padding=(0, 1))
        self.branch3x3_2b = BasicConv2d(next(keys), 384, 384, (3, 1), padding=(1, 0))
        self.branch3x3dbl_1 = BasicConv2d(next(keys), in_channels, 448, 1)
        self.branch3x3dbl_2 = BasicConv2d(next(keys), 448, 384, 3, padding=1)
        self.branch3x3dbl_3a = BasicConv2d(next(keys), 384, 384, (1, 3), padding=(0, 1))
        self.branch3x3dbl_3b = BasicConv2d(next(keys), 384, 384, (3, 1), padding=(1, 0))
        self.branch_pool = BasicConv2d(next(keys), in_channels, 192, 1,
                                       prepare=False)
        self.head = Fused1x1([self.branch1x1, self.branch3x3_1,
                              self.branch3x3dbl_1], pool_tail=self.branch_pool)

    def __call__(self, x):
        b1, b3, bd, bp = self.head(x)
        b3 = jnp.concatenate([self.branch3x3_2a(b3), self.branch3x3_2b(b3)],
                             axis=-1)
        bd = self.branch3x3dbl_2(bd)
        bd = jnp.concatenate([self.branch3x3dbl_3a(bd), self.branch3x3dbl_3b(bd)],
                             axis=-1)
        bp = _avg_pool_then_act(bp, self.branch_pool.shift)
        return jnp.concatenate([b1, b3, bd, bp], axis=-1)


class Inception3:
    def __init__(self, key, num_classes=1000, aux_logits=True,
                 transform_input=False):
        self.aux_logits = aux_logits
        self.transform_input = transform_input
        self.num_classes = num_classes
        keys = iter(jax.random.split(key, 256))
        self.Conv2d_1a_3x3 = BasicConv2d(next(keys), 3, 32, 3, stride=2)
        self.Conv2d_2a_3x3 = BasicConv2d(next(keys), 32, 32, 3)
        self.Conv2d_2b_3x3 = BasicConv2d(next(keys), 32, 64, 3, padding=1)
        self.Conv2d_3b_1x1 = BasicConv2d(next(keys), 64, 80, 1)
        self.Conv2d_4a_3x3 = BasicConv2d(next(keys), 80, 192, 3)
        self.Mixed_5b = InceptionA(keys, 192, pool_features=32)
        self.Mixed_5c = InceptionA(keys, 256, pool_features=64)
        self.Mixed_5d = InceptionA(keys, 288, pool_features=64)
        self.Mixed_6a = InceptionB(keys, 288)
        self.Mixed_6b = InceptionC(keys, 768, channels_7x7=128)
        self.Mixed_6c = InceptionC(keys, 768, channels_7x7=160)
        self.Mixed_6d = InceptionC(keys, 768, channels_7x7=160)
        self.Mixed_6e = InceptionC(keys, 768, channels_7x7=192)
        # TODO(synk): InceptionAux head only runs in training mode; this kernel
        # implements the eval forward (aux skipped, dropout = identity).
        self.Mixed_7a = InceptionD(keys, 768)
        self.Mixed_7b = InceptionE(keys, 1280)
        self.Mixed_7c = InceptionE(keys, 2048)
        fc_w = _trunc_normal(next(keys), (2048, num_classes), stddev=0.1)
        fc_b = jnp.zeros((num_classes,), jnp.float32)
        self.fc_w_p, self.fc_sh_p = prep_matmul(fc_w, fc_b)
        # TODO(synk): weight-only int8 (v6e) / fp8 (v7x) storage with a
        # per-channel scale folded into the epilogue would halve the dominant
        # weight HBM traffic of the mid/late layers at batch 1.

    def __call__(self, x_nchw):
        # layout: input is NCHW (PyTorch); compute runs in NHWC, bf16 activations.
        x = jnp.transpose(x_nchw, (0, 2, 3, 1)).astype(jnp.float32)
        # transform_input=False in this configuration.
        x = self.Conv2d_1a_3x3(x)
        x = self.Conv2d_2a_3x3(x)
        x = self.Conv2d_2b_3x3(x)
        x = max_pool_3x3_s2(x)
        x = self.Conv2d_3b_1x1(x)
        x = self.Conv2d_4a_3x3(x)
        x = max_pool_3x3_s2(x)
        x = self.Mixed_5b(x)
        x = self.Mixed_5c(x)
        x = self.Mixed_5d(x)
        x = self.Mixed_6a(x)
        x = self.Mixed_6b(x)
        x = self.Mixed_6c(x)
        x = self.Mixed_6d(x)
        x = self.Mixed_6e(x)
        x = self.Mixed_7a(x)
        x = self.Mixed_7b(x)
        x = self.Mixed_7c(x)
        # adaptive_avg_pool2d(1) + flatten; dropout is identity in eval.
        x = jnp.mean(x.astype(jnp.float32), axis=(1, 2))        # [B, 2048]
        logits = fused_matmul(x, self.fc_w_p, self.fc_sh_p,
                              n_valid=self.num_classes, relu=False,
                              out_dtype=jnp.float32)
        return logits                                           # [B, num_classes]


if __name__ == "__main__":
    root = jax.random.PRNGKey(0)
    k_params, k_input = jax.random.split(root)

    # 75x75 is the smallest spatial size that survives the Inception-v3
    # downsampling chain (stride-2 convs / pools) down to 1x1 before the head.
    x = jax.random.normal(k_input, (1, 3, 75, 75), dtype=jnp.float32)

    model = Inception3(k_params, num_classes=1000)
    out = model(x)
    out = jax.block_until_ready(out)
    assert out.shape == (1, 1000)
    print("KERNEL_OK")
</pallas_src>

<mosaic_0001>
module attributes {stable_mosaic.version = 11 : i64} {
  func.func @_mm_epilogue_kernel(%arg0: i32, %arg1: i32, %arg2: memref<1376x128xbf16, #tpu.memory_space<vmem>>, %arg3: memref<128x128xbf16, #tpu.memory_space<vmem>>, %arg4: memref<1x128xf32, #tpu.memory_space<vmem>>, %arg5: memref<1376x128xbf16, #tpu.memory_space<vmem>>) attributes {dimension_semantics = [#tpu.dimension_semantics<parallel>, #tpu.dimension_semantics<parallel>], iteration_bounds = array<i64: 1, 1>, scalar_prefetch = 0 : i64, scratch_operands = 0 : i64, tpu.core_type = #tpu.core_type<tc>, window_params = [{transform_indices = @transform_0, window_bounds = array<i64: 1376, 128>}, {transform_indices = @transform_1, window_bounds = array<i64: 128, 128>}, {transform_indices = @transform_2, window_bounds = array<i64: 1, 128>}, {transform_indices = @transform_3, window_bounds = array<i64: 1376, 128>}]} {
    %c0 = arith.constant 0 : index
    %c0_0 = arith.constant 0 : index
    %0 = vector.load %arg2[%c0, %c0_0] : memref<1376x128xbf16, #tpu.memory_space<vmem>>, vector<1376x128xbf16>
    %c0_1 = arith.constant 0 : index
    %c0_2 = arith.constant 0 : index
    %1 = vector.load %arg3[%c0_1, %c0_2] : memref<128x128xbf16, #tpu.memory_space<vmem>>, vector<128x128xbf16>
    %cst = arith.constant dense<0.000000e+00> : vector<1376x128xf32>
    %2 = tpu.matmul %0, %1, %cst {dimension_numbers = #tpu.dot_dimension_numbers<[1], [0], [0], [1], [0, 0, 1, 1], [], []>} : vector<1376x128xbf16>, vector<128x128xbf16>, vector<1376x128xf32> -> vector<1376x128xf32>
    %c0_3 = arith.constant 0 : index
    %c0_4 = arith.constant 0 : index
    %3 = vector.load %arg4[%c0_3, %c0_4] : memref<1x128xf32, #tpu.memory_space<vmem>>, vector<1x128xf32>
    %4 = vector.broadcast %3 : vector<1x128xf32> to vector<1376x128xf32>
    %5 = arith.addf %2, %4 : vector<1376x128xf32>
    %cst_5 = arith.constant 0.000000e+00 : f32
    %6 = vector.broadcast %cst_5 : f32 to vector<1376x128xf32>
    %7 = arith.maximumf %5, %6 : vector<1376x128xf32>
    %8 = arith.truncf %7 : vector<1376x128xf32> to vector<1376x128xbf16>
    %c0_6 = arith.constant 0 : index
    %c0_7 = arith.constant 0 : index
    %9 = vector.load %arg5[%c0_6, %c0_7] : memref<1376x128xbf16, #tpu.memory_space<vmem>>, vector<1376x128xbf16>
    tpu.vector_store %arg5[%c0_6, %c0_7], %8 {strides = array<i32>} : memref<1376x128xbf16, #tpu.memory_space<vmem>>, vector<1376x128xbf16>,
    return
  }
  func.func @transform_0(%arg0: i32, %arg1: i32) -> (i32, i32) {
    %c0_i32 = arith.constant 0 : i32
    %c0_i32_0 = arith.constant 0 : i32
    return %arg0, %c0_i32 : i32, i32
  }
  func.func @transform_1(%arg0: i32, %arg1: i32) -> (i32, i32) {
    %c0_i32 = arith.constant 0 : i32
    %c0_i32_0 = arith.constant 0 : i32
    return %c0_i32, %arg1 : i32, i32
  }
  func.func @transform_2(%arg0: i32, %arg1: i32) -> (i32, i32) {
    %c0_i32 = arith.constant 0 : i32
    %c0_i32_0 = arith.constant 0 : i32
    return %c0_i32, %arg1 : i32, i32
  }
  func.func @transform_3(%arg0: i32, %arg1: i32) -> (i32, i32) {
    %c0_i32 = arith.constant 0 : i32
    return %arg0, %arg1 : i32, i32
  }
}

</mosaic_0001>

<llo_original>
// kernel: fused_matmul.1
$region0: #{fused_matmul.1}
  #allocation0 [shape = 'u32[]', space=smem, size = 0x4, offset = 0x4, fixed_abs, tag = 'smem constant byte address 0x4 - core index']
  #allocation1 [shape = 'u32[144,128]{1,0:T(1,128)}', space=vmem, size = 0x12000, scoped, tag = 'internal scratch']
  %s0 = inlined_call_operand.vmem [shape: bf16[1376,128], index: 0, kind: input, shape index: {}]
  %s1 = inlined_call_operand.vmem [shape: bf16[128,128], index: 1, kind: input, shape index: {}]
  %s2 = inlined_call_operand.vmem [shape: f32[1,128], index: 2, kind: input, shape index: {}]
  %s3 = inlined_call_operand.vmem [shape: bf16[1376,128], index: 3, kind: output, shape index: {}]
  %s4 = sld [smem:[#allocation0]]
  $region22: #{fused_matmul.1} parent=0
    _
  %s6 = ssub.s32 1, %s4
  %s7 = scalar_select 0, %s6, %s4
  // Predicated region
  $region2: #{fused_matmul.1} parent=0 // pred_check
    _
  $region3: #{fused_matmul.1} parent=0 // pred_check_branch
    %9 = sbr.rel (0) target = $region5
  $region4: #{fused_matmul.1} parent=0 // pred_region
    _
  $region5: #{fused_matmul.1} parent=0 // pred_fallthru
    _
  // Predicated region
  $region6: #{fused_matmul.1} parent=0 // pred_check
    _
  $region7: #{fused_matmul.1} parent=0 // pred_check_branch
    %11 = sbr.rel (0) target = $region9
  $region8: #{fused_matmul.1} parent=0 // pred_region
    _
  $region9: #{fused_matmul.1} parent=0 // pred_fallthru
    _
  // Predicated region
  $region10: #{fused_matmul.1} parent=0 // pred_check
    _
  $region11: #{fused_matmul.1} parent=0 // pred_check_branch
    %13 = sbr.rel (0) target = $region13
  $region12: #{fused_matmul.1} parent=0 // pred_region
    _
  $region13: #{fused_matmul.1} parent=0 // pred_fallthru
    _
  %v15 = vld [vmem:[%s0] sm:$0xf]
  %v16 = vld [vmem:[%s0 + $0x4] sm:$0xf]
  %v17 = vld [vmem:[%s0 + $0x8] sm:$0xf]
  %v18 = vld [vmem:[%s0 + $0xc] sm:$0xf]
  %v19 = vld [vmem:[%s0 + $0x10] sm:$0xf]
  %v20 = vld [vmem:[%s0 + $0x14] sm:$0xf]
  %v21 = vld [vmem:[%s0 + $0x18] sm:$0xf]
  %v22 = vld [vmem:[%s0 + $0x1c] sm:$0xf]
  %v23 = vld [vmem:[%s0 + $0x20] sm:$0xf]
  %v24 = vld [vmem:[%s0 + $0x24] sm:$0xf]
  %v25 = vld [vmem:[%s0 + $0x28] sm:$0xf]
  %v26 = vld [vmem:[%s0 + $0x2c] sm:$0xf]
  %v27 = vld [vmem:[%s0 + $0x30] sm:$0xf]
  %v28 = vld [vmem:[%s0 + $0x34] sm:$0xf]
  %v29 = vld [vmem:[%s0 + $0x38] sm:$0xf]
  %v30 = vld [vmem:[%s0 + $0x3c] sm:$0xf]
  %v31 = vld [vmem:[%s0 + $0x40] sm:$0xf]
  %v32 = vld [vmem:[%s0 + $0x44] sm:$0xf]
  %v33 = vld [vmem:[%s0 + $0x48] sm:$0xf]
  %v34 = vld [vmem:[%s0 + $0x4c] sm:$0xf]
  %v35 = vld [vmem:[%s0 + $0x50] sm:$0xf]
  %v36 = vld [vmem:[%s0 + $0x54] sm:$0xf]
  %v37 = vld [vmem:[%s0 + $0x58] sm:$0xf]
  %v38 = vld [vmem:[%s0 + $0x5c] sm:$0xf]
  %v39 = vld [vmem:[%s0 + $0x60] sm:$0xf]
  %v40 = vld [vmem:[%s0 + $0x64] sm:$0xf]
  %v41 = vld [vmem:[%s0 + $0x68] sm:$0xf]
  %v42 = vld [vmem:[%s0 + $0x6c] sm:$0xf]
  %v43 = vld [vmem:[%s0 + $0x70] sm:$0xf]
  %v44 = vld [vmem:[%s0 + $0x74] sm:$0xf]
  %v45 = vld [vmem:[%s0 + $0x78] sm:$0xf]
  %v46 = vld [vmem:[%s0 + $0x7c] sm:$0xf]
  %v47 = vld [vmem:[%s0 + $0x80] sm:$0xf]
  %v48 = vld [vmem:[%s0 + $0x84] sm:$0xf]
  %v49 = vld [vmem:[%s0 + $0x88] sm:$0xf]
  %v50 = vld [vmem:[%s0 + $0x8c] sm:$0xf]
  %v51 = vld [vmem:[%s0 + $0x90] sm:$0xf]
  %v52 = vld [vmem:[%s0 + $0x94] sm:$0xf]
  %v53 = vld [vmem:[%s0 + $0x98] sm:$0xf]
  %v54 = vld [vmem:[%s0 + $0x9c] sm:$0xf]
  %v55 = vld [vmem:[%s0 + $0xa0] sm:$0xf]
  %v56 = vld [vmem:[%s0 + $0xa4] sm:$0xf]
  %v57 = vld [vmem:[%s0 + $0xa8] sm:$0xf]
  %v58 = vld [vmem:[%s0 + $0xac] sm:$0xf]
  %v59 = vld [vmem:[%s0 + $0xb0] sm:$0xf]
  %v60 = vld [vmem:[%s0 + $0xb4] sm:$0xf]
  %v61 = vld [vmem:[%s0 + $0xb8] sm:$0xf]
  %v62 = vld [vmem:[%s0 + $0xbc] sm:$0xf]
  %v63 = vld [vmem:[%s0 + $0xc0] sm:$0xf]
  %v64 = vld [vmem:[%s0 + $0xc4] sm:$0xf]
  %v65 = vld [vmem:[%s0 + $0xc8] sm:$0xf]
  %v66 = vld [vmem:[%s0 + $0xcc] sm:$0xf]
  %v67 = vld [vmem:[%s0 + $0xd0] sm:$0xf]
  %v68 = vld [vmem:[%s0 + $0xd4] sm:$0xf]
  %v69 = vld [vmem:[%s0 + $0xd8] sm:$0xf]
  %v70 = vld [vmem:[%s0 + $0xdc] sm:$0xf]
  %v71 = vld [vmem:[%s0 + $0xe0] sm:$0xf]
  %v72 = vld [vmem:[%s0 + $0xe4] sm:$0xf]
  %v73 = vld [vmem:[%s0 + $0xe8] sm:$0xf]
  %v74 = vld [vmem:[%s0 + $0xec] sm:$0xf]
  %v75 = vld [vmem:[%s0 + $0xf0] sm:$0xf]
  %v76 = vld [vmem:[%s0 + $0xf4] sm:$0xf]
  %v77 = vld [vmem:[%s0 + $0xf8] sm:$0xf]
  %v78 = vld [vmem:[%s0 + $0xfc] sm:$0xf]
  %v79 = vld [vmem:[%s0 + $0x100] sm:$0xf]
  %v80 = vld [vmem:[%s0 + $0x104] sm:$0xf]
  %v81 = vld [vmem:[%s0 + $0x108] sm:$0xf]
  %v82 = vld [vmem:[%s0 + $0x10c] sm:$0xf]
  %v83 = vld [vmem:[%s0 + $0x110] sm:$0xf]
  %v84 = vld [vmem:[%s0 + $0x114] sm:$0xf]
  %v85 = vld [vmem:[%s0 + $0x118] sm:$0xf]
  %v86 = vld [vmem:[%s0 + $0x11c] sm:$0xf]
  %v87 = vld [vmem:[%s0 + $0x120] sm:$0xf]
  %v88 = vld [vmem:[%s0 + $0x124] sm:$0xf]
  %v89 = vld [vmem:[%s0 + $0x128] sm:$0xf]
  %v90 = vld [vmem:[%s0 + $0x12c] sm:$0xf]
  %v91 = vld [vmem:[%s0 + $0x130] sm:$0xf]
  %v92 = vld [vmem:[%s0 + $0x134] sm:$0xf]
  %v93 = vld [vmem:[%s0 + $0x138] sm:$0xf]
  %v94 = vld [vmem:[%s0 + $0x13c] sm:$0xf]
  %v95 = vld [vmem:[%s0 + $0x140] sm:$0xf]
  %v96 = vld [vmem:[%s0 + $0x144] sm:$0xf]
  %v97 = vld [vmem:[%s0 + $0x148] sm:$0xf]
  %v98 = vld [vmem:[%s0 + $0x14c] sm:$0xf]
  %v99 = vld [vmem:[%s0 + $0x150] sm:$0xf]
  %v100 = vld [vmem:[%s0 + $0x154] sm:$0xf]
  %v101 = vld [vmem:[%s0 + $0x158] sm:$0xf]
  %v102 = vld [vmem:[%s0 + $0x15c] sm:$0xf]
  %v103 = vld [vmem:[%s0 + $0x160] sm:$0xf]
  %v104 = vld [vmem:[%s0 + $0x164] sm:$0xf]
  %v105 = vld [vmem:[%s0 + $0x168] sm:$0xf]
  %v106 = vld [vmem:[%s0 + $0x16c] sm:$0xf]
  %v107 = vld [vmem:[%s0 + $0x170] sm:$0xf]
  %v108 = vld [vmem:[%s0 + $0x174] sm:$0xf]
  %v109 = vld [vmem:[%s0 + $0x178] sm:$0xf]
  %v110 = vld [vmem:[%s0 + $0x17c] sm:$0xf]
  %v111 = vld [vmem:[%s0 + $0x180] sm:$0xf]
  %v112 = vld [vmem:[%s0 + $0x184] sm:$0xf]
  %v113 = vld [vmem:[%s0 + $0x188] sm:$0xf]
  %v114 = vld [vmem:[%s0 + $0x18c] sm:$0xf]
  %v115 = vld [vmem:[%s0 + $0x190] sm:$0xf]
  %v116 = vld [vmem:[%s0 + $0x194] sm:$0xf]
  %v117 = vld [vmem:[%s0 + $0x198] sm:$0xf]
  %v118 = vld [vmem:[%s0 + $0x19c] sm:$0xf]
  %v119 = vld [vmem:[%s0 + $0x1a0] sm:$0xf]
  %v120 = vld [vmem:[%s0 + $0x1a4] sm:$0xf]
  %v121 = vld [vmem:[%s0 + $0x1a8] sm:$0xf]
  %v122 = vld [vmem:[%s0 + $0x1ac] sm:$0xf]
  %v123 = vld [vmem:[%s0 + $0x1b0] sm:$0xf]
  %v124 = vld [vmem:[%s0 + $0x1b4] sm:$0xf]
  %v125 = vld [vmem:[%s0 + $0x1b8] sm:$0xf]
  %v126 = vld [vmem:[%s0 + $0x1bc] sm:$0xf]
  %v127 = vld [vmem:[%s0 + $0x1c0] sm:$0xf]
  %v128 = vld [vmem:[%s0 + $0x1c4] sm:$0xf]
  %v129 = vld [vmem:[%s0 + $0x1c8] sm:$0xf]
  %v130 = vld [vmem:[%s0 + $0x1cc] sm:$0xf]
  %v131 = vld [vmem:[%s0 + $0x1d0] sm:$0xf]
  %v132 = vld [vmem:[%s0 + $0x1d4] sm:$0xf]
  %v133 = vld [vmem:[%s0 + $0x1d8] sm:$0xf]
  %v134 = vld [vmem:[%s0 + $0x1dc] sm:$0xf]
  %v135 = vld [vmem:[%s0 + $0x1e0] sm:$0xf]
  %v136 = vld [vmem:[%s0 + $0x1e4] sm:$0xf]
  %v137 = vld [vmem:[%s0 + $0x1e8] sm:$0xf]
  %v138 = vld [vmem:[%s0 + $0x1ec] sm:$0xf]
  %v139 = vld [vmem:[%s0 + $0x1f0] sm:$0xf]
  %v140 = vld [vmem:[%s0 + $0x1f4] sm:$0xf]
  %v141 = vld [vmem:[%s0 + $0x1f8] sm:$0xf]
  %v142 = vld [vmem:[%s0 + $0x1fc] sm:$0xf]
  %v143 = vld [vmem:[%s0 + $0x200] sm:$0xf]
  %v144 = vld [vmem:[%s0 + $0x204] sm:$0xf]
  %v145 = vld [vmem:[%s0 + $0x208] sm:$0xf]
  %v146 = vld [vmem:[%s0 + $0x20c] sm:$0xf]
  %v147 = vld [vmem:[%s0 + $0x210] sm:$0xf]
  %v148 = vld [vmem:[%s0 + $0x214] sm:$0xf]
  %v149 = vld [vmem:[%s0 + $0x218] sm:$0xf]
  %v150 = vld [vmem:[%s0 + $0x21c] sm:$0xf]
  %v151 = vld [vmem:[%s0 + $0x220] sm:$0xf]
  %v152 = vld [vmem:[%s0 + $0x224] sm:$0xf]
  %v153 = vld [vmem:[%s0 + $0x228] sm:$0xf]
  %v154 = vld [vmem:[%s0 + $0x22c] sm:$0xf]
  %v155 = vld [vmem:[%s0 + $0x230] sm:$0xf]
  %v156 = vld [vmem:[%s0 + $0x234] sm:$0xf]
  %v157 = vld [vmem:[%s0 + $0x238] sm:$0xf]
  %v158 = vld [vmem:[%s0 + $0x23c] sm:$0xf]
  %v159 = vld [vmem:[%s0 + $0x240] sm:$0xf]
  %v160 = vld [vmem:[%s0 + $0x244] sm:$0xf]
  %v161 = vld [vmem:[%s0 + $0x248] sm:$0xf]
  %v162 = vld [vmem:[%s0 + $0x24c] sm:$0xf]
  %v163 = vld [vmem:[%s0 + $0x250] sm:$0xf]
  %v164 = vld [vmem:[%s0 + $0x254] sm:$0xf]
  %v165 = vld [vmem:[%s0 + $0x258] sm:$0xf]
  %v166 = vld [vmem:[%s0 + $0x25c] sm:$0xf]
  %v167 = vld [vmem:[%s0 + $0x260] sm:$0xf]
  %v168 = vld [vmem:[%s0 + $0x264] sm:$0xf]
  %v169 = vld [vmem:[%s0 + $0x268] sm:$0xf]
  %v170 = vld [vmem:[%s0 + $0x26c] sm:$0xf]
  %v171 = vld [vmem:[%s0 + $0x270] sm:$0xf]
  %v172 = vld [vmem:[%s0 + $0x274] sm:$0xf]
  %v173 = vld [vmem:[%s0 + $0x278] sm:$0xf]
  %v174 = vld [vmem:[%s0 + $0x27c] sm:$0xf]
  %v175 = vld [vmem:[%s0 + $0x280] sm:$0xf]
  %v176 = vld [vmem:[%s0 + $0x284] sm:$0xf]
  %v177 = vld [vmem:[%s0 + $0x288] sm:$0xf]
  %v178 = vld [vmem:[%s0 + $0x28c] sm:$0xf]
  %v179 = vld [vmem:[%s0 + $0x290] sm:$0xf]
  %v180 = vld [vmem:[%s0 + $0x294] sm:$0xf]
  %v181 = vld [vmem:[%s0 + $0x298] sm:$0xf]
  %v182 = vld [vmem:[%s0 + $0x29c] sm:$0xf]
  %v183 = vld [vmem:[%s0 + $0x2a0] sm:$0xf]
  %v184 = vld [vmem:[%s0 + $0x2a4] sm:$0xf]
  %v185 = vld [vmem:[%s0 + $0x2a8] sm:$0xf]
  %v186 = vld [vmem:[%s0 + $0x2ac] sm:$0xf]
  %v187 = vld [vmem:[%s1] sm:$0xf]
  %v188 = vld [vmem:[%s1 + $0x4] sm:$0xf]
  %v189 = vld [vmem:[%s1 + $0x8] sm:$0xf]
  %v190 = vld [vmem:[%s1 + $0xc] sm:$0xf]
  %v191 = vld [vmem:[%s1 + $0x10] sm:$0xf]
  %v192 = vld [vmem:[%s1 + $0x14] sm:$0xf]
  %v193 = vld [vmem:[%s1 + $0x18] sm:$0xf]
  %v194 = vld [vmem:[%s1 + $0x1c] sm:$0xf]
  %v195 = vld [vmem:[%s1 + $0x20] sm:$0xf]
  %v196 = vld [vmem:[%s1 + $0x24] sm:$0xf]
  %v197 = vld [vmem:[%s1 + $0x28] sm:$0xf]
  %v198 = vld [vmem:[%s1 + $0x2c] sm:$0xf]
  %v199 = vld [vmem:[%s1 + $0x30] sm:$0xf]
  %v200 = vld [vmem:[%s1 + $0x34] sm:$0xf]
  %v201 = vld [vmem:[%s1 + $0x38] sm:$0xf]
  %v202 = vld [vmem:[%s1 + $0x3c] sm:$0xf]
  %v203 = vld [vmem:[%s2] sm:$0x1]
  %v205 = vlaneseq
  %v206 = vshrl.u32 %v205, 7
  %v207 = vsub.s32 0, %v206
  %v208 = vrot.slane %v203, %v207
  %v382 = vunpack.c.l.b16 %v15
  %v383 = vunpack.c.l.b16 %v16
  %v384 = vunpack.c.l.b16 %v17
  %v385 = vunpack.c.l.b16 %v18
  %v386 = vunpack.c.l.b16 %v19
  %v387 = vunpack.c.l.b16 %v20
  %v388 = vunpack.c.l.b16 %v21
  %v389 = vunpack.c.l.b16 %v22
  %v390 = vunpack.c.l.b16 %v23
  %v391 = vunpack.c.l.b16 %v24
  %v392 = vunpack.c.l.b16 %v25
  %v393 = vunpack.c.l.b16 %v26
  %v394 = vunpack.c.l.b16 %v27
  %v395 = vunpack.c.l.b16 %v28
  %v396 = vunpack.c.l.b16 %v29
  %v397 = vunpack.c.l.b16 %v30
  %v398 = vunpack.c.l.b16 %v31
  %v399 = vunpack.c.l.b16 %v32
  %v400 = vunpack.c.l.b16 %v33
  %v401 = vunpack.c.l.b16 %v34
  %v402 = vunpack.c.l.b16 %v35
  %v403 = vunpack.c.l.b16 %v36
  %v404 = vunpack.c.l.b16 %v37
  %v405 = vunpack.c.l.b16 %v38
  %v406 = vunpack.c.l.b16 %v39
  %v407 = vunpack.c.l.b16 %v40
  %v408 = vunpack.c.l.b16 %v41
  %v409 = vunpack.c.l.b16 %v42
  %v410 = vunpack.c.l.b16 %v43
  %v411 = vunpack.c.l.b16 %v44
  %v412 = vunpack.c.l.b16 %v45
  %v413 = vunpack.c.l.b16 %v46
  %v414 = vunpack.c.l.b16 %v47
  %v415 = vunpack.c.l.b16 %v48
  %v416 = vunpack.c.l.b16 %v49
  %v417 = vunpack.c.l.b16 %v50
  %v418 = vunpack.c.l.b16 %v51
  %v419 = vunpack.c.l.b16 %v52
  %v420 = vunpack.c.l.b16 %v53
  %v421 = vunpack.c.l.b16 %v54
  %v422 = vunpack.c.l.b16 %v55
  %v423 = vunpack.c.l.b16 %v56
  %v424 = vunpack.c.l.b16 %v57
  %v425 = vunpack.c.l.b16 %v58
  %v426 = vunpack.c.l.b16 %v59
  %v427 = vunpack.c.l.b16 %v60
  %v428 = vunpack.c.l.b16 %v61
  %v429 = vunpack.c.l.b16 %v62
  %v430 = vunpack.c.l.b16 %v63
  %v431 = vunpack.c.l.b16 %v64
  %v432 = vunpack.c.l.b16 %v65
  %v433 = vunpack.c.l.b16 %v66
  %v434 = vunpack.c.l.b16 %v67
  %v435 = vunpack.c.l.b16 %v68
  %v436 = vunpack.c.l.b16 %v69
  %v437 = vunpack.c.l.b16 %v70
  %v438 = vunpack.c.l.b16 %v71
  %v439 = vunpack.c.l.b16 %v72
  %v440 = vunpack.c.l.b16 %v73
  %v441 = vunpack.c.l.b16 %v74
  %v442 = vunpack.c.l.b16 %v75
  %v443 = vunpack.c.l.b16 %v76
  %v444 = vunpack.c.l.b16 %v77
  %v445 = vunpack.c.l.b16 %v78
  %v446 = vunpack.c.l.b16 %v79
  %v447 = vunpack.c.l.b16 %v80
  %v448 = vunpack.c.l.b16 %v81
  %v449 = vunpack.c.l.b16 %v82
  %v450 = vunpack.c.l.b16 %v83
  %v451 = vunpack.c.l.b16 %v84
  %v452 = vunpack.c.l.b16 %v85
  %v453 = vunpack.c.l.b16 %v86
  %v454 = vunpack.c.l.b16 %v87
  %v455 = vunpack.c.l.b16 %v88
  %v456 = vunpack.c.l.b16 %v89
  %v457 = vunpack.c.l.b16 %v90
  %v458 = vunpack.c.l.b16 %v91
  %v459 = vunpack.c.l.b16 %v92
  %v460 = vunpack.c.l.b16 %v93
  %v461 = vunpack.c.l.b16 %v94
  %v462 = vunpack.c.l.b16 %v95
  %v463 = vunpack.c.l.b16 %v96
  %v464 = vunpack.c.l.b16 %v97
  %v465 = vunpack.c.l.b16 %v98
  %v466 = vunpack.c.l.b16 %v99
  %v467 = vunpack.c.l.b16 %v100
  %v468 = vunpack.c.l.b16 %v101
  %v469 = vunpack.c.l.b16 %v102
  %v470 = vunpack.c.l.b16 %v103
  %v471 = vunpack.c.l.b16 %v104
  %v472 = vunpack.c.l.b16 %v105
  %v473 = vunpack.c.l.b16 %v106
  %v474 = vunpack.c.l.b16 %v107
  %v475 = vunpack.c.l.b16 %v108
  %v476 = vunpack.c.l.b16 %v109
  %v477 = vunpack.c.l.b16 %v110
  %v478 = vunpack.c.l.b16 %v111
  %v479 = vunpack.c.l.b16 %v112
  %v480 = vunpack.c.l.b16 %v113
  %v481 = vunpack.c.l.b16 %v114
  %v482 = vunpack.c.l.b16 %v115
  %v483 = vunpack.c.l.b16 %v116
  %v484 = vunpack.c.l.b16 %v117
  %v485 = vunpack.c.l.b16 %v118
  %v486 = vunpack.c.l.b16 %v119
  %v487 = vunpack.c.l.b16 %v120
  %v488 = vunpack.c.l.b16 %v121
  %v489 = vunpack.c.l.b16 %v122
  %v490 = vunpack.c.l.b16 %v123
  %v491 = vunpack.c.l.b16 %v124
  %v492 = vunpack.c.l.b16 %v125
  %v493 = vunpack.c.l.b16 %v126
  %v494 = vunpack.c.l.b16 %v127
  %v495 = vunpack.c.l.b16 %v128
  %v496 = vunpack.c.l.b16 %v129
  %v497 = vunpack.c.l.b16 %v130
  %v498 = vunpack.c.l.b16 %v131
  %v499 = vunpack.c.l.b16 %v132
  %v500 = vunpack.c.l.b16 %v133
  %v501 = vunpack.c.l.b16 %v134
  %v502 = vunpack.c.l.b16 %v135
  %v503 = vunpack.c.l.b16 %v136
  %v504 = vunpack.c.l.b16 %v137
  %v505 = vunpack.c.l.b16 %v138
  %v506 = vunpack.c.l.b16 %v139
  %v507 = vunpack.c.l.b16 %v140
  %v508 = vunpack.c.l.b16 %v141
  %v509 = vunpack.c.l.b16 %v142
  %v510 = vunpack.c.l.b16 %v143
  %v511 = vunpack.c.l.b16 %v144
  %v512 = vunpack.c.l.b16 %v145
  %v513 = vunpack.c.l.b16 %v146
  %v514 = vunpack.c.l.b16 %v147
  %v515 = vunpack.c.l.b16 %v148
  %v516 = vunpack.c.l.b16 %v149
  %v517 = vunpack.c.l.b16 %v150
  %v518 = vunpack.c.l.b16 %v151
  %v519 = vunpack.c.l.b16 %v152
  %v520 = vunpack.c.l.b16 %v153
  %v521 = vunpack.c.l.b16 %v154
  %v522 = vunpack.c.l.b16 %v155
  %v523 = vunpack.c.l.b16 %v156
  %v524 = vunpack.c.l.b16 %v157
  %v525 = vunpack.c.l.b16 %v158
  %v526 = vunpack.c.l.b16 %v159
  %v527 = vunpack.c.l.b16 %v160
  %v528 = vunpack.c.l.b16 %v161
  %v529 = vunpack.c.l.b16 %v162
  %v530 = vunpack.c.l.b16 %v163
  %v531 = vunpack.c.l.b16 %v164
  %v532 = vunpack.c.l.b16 %v165
  %v533 = vunpack.c.l.b16 %v166
  %v534 = vunpack.c.l.b16 %v167
  %v535 = vunpack.c.l.b16 %v168
  %v536 = vunpack.c.l.b16 %v169
  %v537 = vunpack.c.l.b16 %v170
  %v538 = vunpack.c.l.b16 %v171
  %v539 = vunpack.c.l.b16 %v172
  %v540 = vunpack.c.l.b16 %v173
  %v541 = vunpack.c.l.b16 %v174
  %v542 = vunpack.c.l.b16 %v175
  %v543 = vunpack.c.l.b16 %v176
  %v544 = vunpack.c.l.b16 %v177
  %v545 = vunpack.c.l.b16 %v178
  %v546 = vunpack.c.l.b16 %v179
  %v547 = vunpack.c.l.b16 %v180
  %v548 = vunpack.c.l.b16 %v181
  %v549 = vunpack.c.l.b16 %v182
  %v550 = vunpack.c.l.b16 %v183
  %v551 = vunpack.c.l.b16 %v184
  %v552 = vunpack.c.l.b16 %v185
  %v553 = vunpack.c.l.b16 %v186
  %v554 = vpack.c.b16 %v383, %v382
  %v555 = vpack.c.b16 %v385, %v384
  %v556 = vpack.c.b16 %v387, %v386
  %v557 = vpack.c.b16 %v389, %v388
  %v558 = vpack.c.b16 %v391, %v390
  %v559 = vpack.c.b16 %v393, %v392
  %v560 = vpack.c.b16 %v395, %v394
  %v561 = vpack.c.b16 %v397, %v396
  %v562 = vpack.c.b16 %v399, %v398
  %v563 = vpack.c.b16 %v401, %v400
  %v564 = vpack.c.b16 %v403, %v402
  %v565 = vpack.c.b16 %v405, %v404
  %v566 = vpack.c.b16 %v407, %v406
  %v567 = vpack.c.b16 %v409, %v408
  %v568 = vpack.c.b16 %v411, %v410
  %v569 = vpack.c.b16 %v413, %v412
  %v570 = vpack.c.b16 %v415, %v414
  %v571 = vpack.c.b16 %v417, %v416
  %v572 = vpack.c.b16 %v419, %v418
  %v573 = vpack.c.b16 %v421, %v420
  %v574 = vpack.c.b16 %v423, %v422
  %v575 = vpack.c.b16 %v425, %v424
  %v576 = vpack.c.b16 %v427, %v426
  %v577 = vpack.c.b16 %v429, %v428
  %v578 = vpack.c.b16 %v431, %v430
  %v579 = vpack.c.b16 %v433, %v432
  %v580 = vpack.c.b16 %v435, %v434
  %v581 = vpack.c.b16 %v437, %v436
  %v582 = vpack.c.b16 %v439, %v438
  %v583 = vpack.c.b16 %v441, %v440
  %v584 = vpack.c.b16 %v443, %v442
  %v585 = vpack.c.b16 %v445, %v444
  %v586 = vpack.c.b16 %v447, %v446
  %v587 = vpack.c.b16 %v449, %v448
  %v588 = vpack.c.b16 %v451, %v450
  %v589 = vpack.c.b16 %v453, %v452
  %v590 = vpack.c.b16 %v455, %v454
  %v591 = vpack.c.b16 %v457, %v456
  %v592 = vpack.c.b16 %v459, %v458
  %v593 = vpack.c.b16 %v461, %v460
  %v594 = vpack.c.b16 %v463, %v462
  %v595 = vpack.c.b16 %v465, %v464
  %v596 = vpack.c.b16 %v467, %v466
  %v597 = vpack.c.b16 %v469, %v468
  %v598 = vpack.c.b16 %v471, %v470
  %v599 = vpack.c.b16 %v473, %v472
  %v600 = vpack.c.b16 %v475, %v474
  %v601 = vpack.c.b16 %v477, %v476
  %v602 = vpack.c.b16 %v479, %v478
  %v603 = vpack.c.b16 %v481, %v480
  %v604 = vpack.c.b16 %v483, %v482
  %v605 = vpack.c.b16 %v485, %v484
  %v606 = vpack.c.b16 %v487, %v486
  %v607 = vpack.c.b16 %v489, %v488
  %v608 = vpack.c.b16 %v491, %v490
  %v609 = vpack.c.b16 %v493, %v492
  %v610 = vpack.c.b16 %v495, %v494
  %v611 = vpack.c.b16 %v497, %v496
  %v612 = vpack.c.b16 %v499, %v498
  %v613 = vpack.c.b16 %v501, %v500
  %v614 = vpack.c.b16 %v503, %v502
  %v615 = vpack.c.b16 %v505, %v504
  %v616 = vpack.c.b16 %v507, %v506
  %v617 = vpack.c.b16 %v509, %v508
  %v618 = vpack.c.b16 %v511, %v510
  %v619 = vpack.c.b16 %v513, %v512
  %v620 = vpack.c.b16 %v515, %v514
  %v621 = vpack.c.b16 %v517, %v516
  %v622 = vpack.c.b16 %v519, %v518
  %v623 = vpack.c.b16 %v521, %v520
  %v624 = vpack.c.b16 %v523, %v522
  %v625 = vpack.c.b16 %v525, %v524
  %v626 = vpack.c.b16 %v527, %v526
  %v627 = vpack.c.b16 %v529, %v528
  %v628 = vpack.c.b16 %v531, %v530
  %v629 = vpack.c.b16 %v533, %v532
  %v630 = vpack.c.b16 %v535, %v534
  %v631 = vpack.c.b16 %v537, %v536
  %v632 = vpack.c.b16 %v539, %v538
  %v633 = vpack.c.b16 %v541, %v540
  %v634 = vpack.c.b16 %v543, %v542
  %v635 = vpack.c.b16 %v545, %v544
  %v636 = vpack.c.b16 %v547, %v546
  %v637 = vpack.c.b16 %v549, %v548
  %v638 = vpack.c.b16 %v551, %v550
  %v639 = vpack.c.b16 %v553, %v552
  %v742 = vunpack.c.l.b16 %v187
  %v743 = vunpack.c.l.b16 %v188
  %v744 = vunpack.c.l.b16 %v189
  %v745 = vunpack.c.l.b16 %v190
  %v746 = vunpack.c.l.b16 %v191
  %v747 = vunpack.c.l.b16 %v192
  %v748 = vunpack.c.l.b16 %v193
  %v749 = vunpack.c.l.b16 %v194
  %v750 = vunpack.c.l.b16 %v195
  %v751 = vunpack.c.l.b16 %v196
  %v752 = vunpack.c.l.b16 %v197
  %v753 = vunpack.c.l.b16 %v198
  %v754 = vunpack.c.l.b16 %v199
  %v755 = vunpack.c.l.b16 %v200
  %v756 = vunpack.c.l.b16 %v201
  %v757 = vunpack.c.l.b16 %v202
  %v758 = vpack.c.b16 %v743, %v742
  %v759 = vpack.c.b16 %v745, %v744
  %v760 = vpack.c.b16 %v747, %v746
  %v761 = vpack.c.b16 %v749, %v748
  %v762 = vpack.c.b16 %v751, %v750
  %v763 = vpack.c.b16 %v753, %v752
  %v764 = vpack.c.b16 %v755, %v754
  %v765 = vpack.c.b16 %v757, %v756
  %774 = vmatprep.subr.bf16.mxu0 0
  %775 = vmatpush1.bf16.msra.mxu0 %v765
  %776 = vmatprep.subr.bf16.mxu0 0
  %777 = vmatpush1.bf16.msra.mxu0 %v764
  %778 = vmatprep.subr.bf16.mxu0 0
  %779 = vmatpush1.bf16.msra.mxu0 %v763
  %780 = vmatprep.subr.bf16.mxu0 0
  %781 = vmatpush1.bf16.msra.mxu0 %v762
  %782 = vmatprep.subr.bf16.mxu0 0
  %783 = vmatpush1.bf16.msra.mxu0 %v761
  %784 = vmatprep.subr.bf16.mxu0 0
  %785 = vmatpush1.bf16.msra.mxu0 %v760
  %786 = vmatprep.subr.bf16.mxu0 0
  %787 = vmatpush1.bf16.msra.mxu0 %v759
  %788 = vmatprep.subr.bf16.mxu0 0
  %789 = vmatpush1.bf16.msra.mxu0 %v758
  %790 = vmatprep.subr.bf16.mxu0 0
  %791 = vmatpush2.bf16.msra.mxu0 0
  %792 = vmatprep.subr.bf16.mxu0 0
  %793 = vmatpush2.bf16.msra.mxu0 0
  %794 = vmatprep.subr.bf16.mxu0 0
  %795 = vmatpush2.bf16.msra.mxu0 0
  %796 = vmatprep.subr.bf16.mxu0 0
  %797 = vmatpush2.bf16.msra.mxu0 0
  %798 = vmatprep.subr.bf16.mxu0 0
  %799 = vmatpush2.bf16.msra.mxu0 0
  %800 = vmatprep.subr.bf16.mxu0 0
  %801 = vmatpush2.bf16.msra.mxu0 0
  %802 = vmatprep.subr.bf16.mxu0 0
  %803 = vmatpush2.bf16.msra.mxu0 0
  %804 = vmatprep.subr.bf16.mxu0 0
  %805 = vmatpush2.bf16.msra.mxu0 0
  %806 = vmatprep.mubr.bf16.mxu0 0
  %807 = vmatmul.mubr.bf16.gmra.mxu0 %v554
  %v808 = vpop.f32.mrf.mxu0
  %v809 = vadd.f32 %v208, %v808
  %v810 = vpop.f32.mrf.mxu0
  %v811 = vpop.f32.mrf.mxu0
  %v812 = vadd.f32 %v208, %v811
  %v813 = vpop.f32.mrf.mxu0
  %814 = vmatprep.mubr.bf16.mxu0 0
  %815 = vmatmul.mubr.bf16.gmra.mxu0 %v555
  %v816 = vpop.f32.mrf.mxu0
  %v817 = vadd.f32 %v208, %v816
  %v818 = vpop.f32.mrf.mxu0
  %v819 = vpop.f32.mrf.mxu0
  %v820 = vadd.f32 %v208, %v819
  %v821 = vpop.f32.mrf.mxu0
  %822 = vmatprep.mubr.bf16.mxu0 0
  %823 = vmatmul.mubr.bf16.gmra.mxu0 %v556
  %v824 = vpop.f32.mrf.mxu0
  %v825 = vadd.f32 %v208, %v824
  %v826 = vpop.f32.mrf.mxu0
  %v827 = vpop.f32.mrf.mxu0
  %v828 = vadd.f32 %v208, %v827
  %v829 = vpop.f32.mrf.mxu0
  %830 = vmatprep.mubr.bf16.mxu0 0
  %831 = vmatmul.mubr.bf16.gmra.mxu0 %v557
  %v832 = vpop.f32.mrf.mxu0
  %v833 = vadd.f32 %v208, %v832
  %v834 = vpop.f32.mrf.mxu0
  %v835 = vpop.f32.mrf.mxu0
  %v836 = vadd.f32 %v208, %v835
  %v837 = vpop.f32.mrf.mxu0
  %838 = vmatprep.mubr.bf16.mxu0 0
  %839 = vmatmul.mubr.bf16.gmra.mxu0 %v558
  %v840 = vpop.f32.mrf.mxu0
  %v841 = vadd.f32 %v208, %v840
  %v842 = vpop.f32.mrf.mxu0
  %v843 = vpop.f32.mrf.mxu0
  %v844 = vadd.f32 %v208, %v843
  %v845 = vpop.f32.mrf.mxu0
  %846 = vmatprep.mubr.bf16.mxu0 0
  %847 = vmatmul.mubr.bf16.gmra.mxu0 %v559
  %v848 = vpop.f32.mrf.mxu0
  %v849 = vadd.f32 %v208, %v848
  %v850 = vpop.f32.mrf.mxu0
  %v851 = vpop.f32.mrf.mxu0
  %v852 = vadd.f32 %v208, %v851
  %v853 = vpop.f32.mrf.mxu0
  %854 = vmatprep.mubr.bf16.mxu0 0
  %855 = vmatmul.mubr.bf16.gmra.mxu0 %v560
  %v856 = vpop.f32.mrf.mxu0
  %v857 = vadd.f32 %v208, %v856
  %v858 = vpop.f32.mrf.mxu0
  %v859 = vpop.f32.mrf.mxu0
  %v860 = vadd.f32 %v208, %v859
  %v861 = vpop.f32.mrf.mxu0
  %862 = vmatprep.mubr.bf16.mxu0 0
  %863 = vmatmul.mubr.bf16.gmra.mxu0 %v561
  %v864 = vpop.f32.mrf.mxu0
  %v865 = vadd.f32 %v208, %v864
  %v866 = vpop.f32.mrf.mxu0
  %v867 = vpop.f32.mrf.mxu0
  %v868 = vadd.f32 %v208, %v867
  %v869 = vpop.f32.mrf.mxu0
  %870 = vmatprep.mubr.bf16.mxu0 0
  %871 = vmatmul.mubr.bf16.gmra.mxu0 %v562
  %v872 = vpop.f32.mrf.mxu0
  %v873 = vadd.f32 %v208, %v872
  %v874 = vpop.f32.mrf.mxu0
  %v875 = vpop.f32.mrf.mxu0
  %v876 = vadd.f32 %v208, %v875
  %v877 = vpop.f32.mrf.mxu0
  %878 = vmatprep.mubr.bf16.mxu0 0
  %879 = vmatmul.mubr.bf16.gmra.mxu0 %v563
  %v880 = vpop.f32.mrf.mxu0
  %v881 = vadd.f32 %v208, %v880
  %v882 = vpop.f32.mrf.mxu0
  %v883 = vpop.f32.mrf.mxu0
  %v884 = vadd.f32 %v208, %v883
  %v885 = vpop.f32.mrf.mxu0
  %886 = vmatprep.mubr.bf16.mxu0 0
  %887 = vmatmul.mubr.bf16.gmra.mxu0 %v564
  %v888 = vpop.f32.mrf.mxu0
  %v889 = vadd.f32 %v208, %v888
  %v890 = vpop.f32.mrf.mxu0
  %v891 = vpop.f32.mrf.mxu0
  %v892 = vadd.f32 %v208, %v891
  %v893 = vpop.f32.mrf.mxu0
  %894 = vmatprep.mubr.bf16.mxu0 0
  %895 = vmatmul.mubr.bf16.gmra.mxu0 %v565
  %v896 = vpop.f32.mrf.mxu0
  %v897 = vadd.f32 %v208, %v896
  %v898 = vpop.f32.mrf.mxu0
  %v899 = vpop.f32.mrf.mxu0
  %v900 = vadd.f32 %v208, %v899
  %v901 = vpop.f32.mrf.mxu0
  %902 = vmatprep.mubr.bf16.mxu0 0
  %903 = vmatmul.mubr.bf16.gmra.mxu0 %v566
  %v904 = vpop.f32.mrf.mxu0
  %v905 = vadd.f32 %v208, %v904
  %v906 = vpop.f32.mrf.mxu0
  %v907 = vpop.f32.mrf.mxu0
  %v908 = vadd.f32 %v208, %v907
  %v909 = vpop.f32.mrf.mxu0
  %910 = vmatprep.mubr.bf16.mxu0 0
  %911 = vmatmul.mubr.bf16.gmra.mxu0 %v567
  %v912 = vpop.f32.mrf.mxu0
  %v913 = vadd.f32 %v208, %v912
  %v914 = vpop.f32.mrf.mxu0
  %v915 = vpop.f32.mrf.mxu0
  %v916 = vadd.f32 %v208, %v915
  %v917 = vpop.f32.mrf.mxu0
  %918 = vmatprep.mubr.bf16.mxu0 0
  %919 = vmatmul.mubr.bf16.gmra.mxu0 %v568
  %v920 = vpop.f32.mrf.mxu0
  %v921 = vadd.f32 %v208, %v920
  %v922 = vpop.f32.mrf.mxu0
  %v923 = vpop.f32.mrf.mxu0
  %v924 = vadd.f32 %v208, %v923
  %v925 = vpop.f32.mrf.mxu0
  %926 = vmatprep.mubr.bf16.mxu0 0
  %927 = vmatmul.mubr.bf16.gmra.mxu0 %v569
  %v928 = vpop.f32.mrf.mxu0
  %v929 = vadd.f32 %v208, %v928
  %v930 = vpop.f32.mrf.mxu0
  %v931 = vpop.f32.mrf.mxu0
  %v932 = vadd.f32 %v208, %v931
  %v933 = vpop.f32.mrf.mxu0
  %934 = vmatprep.mubr.bf16.mxu0 0
  %935 = vmatmul.mubr.bf16.gmra.mxu0 %v570
  %v936 = vpop.f32.mrf.mxu0
  %v937 = vadd.f32 %v208, %v936
  %v938 = vpop.f32.mrf.mxu0
  %v939 = vpop.f32.mrf.mxu0
  %v940 = vadd.f32 %v208, %v939
  %v941 = vpop.f32.mrf.mxu0
  %942 = vmatprep.mubr.bf16.mxu0 0
  %943 = vmatmul.mubr.bf16.gmra.mxu0 %v571
  %v944 = vpop.f32.mrf.mxu0
  %v945 = vadd.f32 %v208, %v944
  %v946 = vpop.f32.mrf.mxu0
  %v947 = vpop.f32.mrf.mxu0
  %v948 = vadd.f32 %v208, %v947
  %v949 = vpop.f32.mrf.mxu0
  %950 = vmatprep.mubr.bf16.mxu0 0
  %951 = vmatmul.mubr.bf16.gmra.mxu0 %v572
  %v952 = vpop.f32.mrf.mxu0
  %v953 = vadd.f32 %v208, %v952
  %v954 = vpop.f32.mrf.mxu0
  %v955 = vpop.f32.mrf.mxu0
  %v956 = vadd.f32 %v208, %v955
  %v957 = vpop.f32.mrf.mxu0
  %958 = vmatprep.mubr.bf16.mxu0 0
  %959 = vmatmul.mubr.bf16.gmra.mxu0 %v573
  %v960 = vpop.f32.mrf.mxu0
  %v961 = vadd.f32 %v208, %v960
  %v962 = vpop.f32.mrf.mxu0
  %v963 = vpop.f32.mrf.mxu0
  %v964 = vadd.f32 %v208, %v963
  %v965 = vpop.f32.mrf.mxu0
  %966 = vmatprep.mubr.bf16.mxu0 0
  %967 = vmatmul.mubr.bf16.gmra.mxu0 %v574
  %v968 = vpop.f32.mrf.mxu0
  %v969 = vadd.f32 %v208, %v968
  %v970 = vpop.f32.mrf.mxu0
  %v971 = vpop.f32.mrf.mxu0
  %v972 = vadd.f32 %v208, %v971
  %v973 = vpop.f32.mrf.mxu0
  %974 = vmatprep.mubr.bf16.mxu0 0
  %975 = vmatmul.mubr.bf16.gmra.mxu0 %v575
  %v976 = vpop.f32.mrf.mxu0
  %v977 = vadd.f32 %v208, %v976
  %v978 = vpop.f32.mrf.mxu0
  %v979 = vpop.f32.mrf.mxu0
  %v980 = vadd.f32 %v208, %v979
  %v981 = vpop.f32.mrf.mxu0
  %982 = vmatprep.mubr.bf16.mxu0 0
  %983 = vmatmul.mubr.bf16.gmra.mxu0 %v576
  %v984 = vpop.f32.mrf.mxu0
  %v985 = vadd.f32 %v208, %v984
  %v986 = vpop.f32.mrf.mxu0
  %v987 = vpop.f32.mrf.mxu0
  %v988 = vadd.f32 %v208, %v987
  %v989 = vpop.f32.mrf.mxu0
  %990 = vmatprep.mubr.bf16.mxu0 0
  %991 = vmatmul.mubr.bf16.gmra.mxu0 %v577
  %v992 = vpop.f32.mrf.mxu0
  %v993 = vadd.f32 %v208, %v992
  %v994 = vpop.f32.mrf.mxu0
  %v995 = vpop.f32.mrf.mxu0
  %v996 = vadd.f32 %v208, %v995
  %v997 = vpop.f32.mrf.mxu0
  %998 = vmatprep.mubr.bf16.mxu0 0
  %999 = vmatmul.mubr.bf16.gmra.mxu0 %v578
  %v1000 = vpop.f32.mrf.mxu0
  %v1001 = vadd.f32 %v208, %v1000
  %v1002 = vpop.f32.mrf.mxu0
  %v1003 = vpop.f32.mrf.mxu0
  %v1004 = vadd.f32 %v208, %v1003
  %v1005 = vpop.f32.mrf.mxu0
  %1006 = vmatprep.mubr.bf16.mxu0 0
  %1007 = vmatmul.mubr.bf16.gmra.mxu0 %v579
  %v1008 = vpop.f32.mrf.mxu0
  %v1009 = vadd.f32 %v208, %v1008
  %v1010 = vpop.f32.mrf.mxu0
  %v1011 = vpop.f32.mrf.mxu0
  %v1012 = vadd.f32 %v208, %v1011
  %v1013 = vpop.f32.mrf.mxu0
  %1014 = vmatprep.mubr.bf16.mxu0 0
  %1015 = vmatmul.mubr.bf16.gmra.mxu0 %v580
  %v1016 = vpop.f32.mrf.mxu0
  %v1017 = vadd.f32 %v208, %v1016
  %v1018 = vpop.f32.mrf.mxu0
  %v1019 = vpop.f32.mrf.mxu0
  %v1020 = vadd.f32 %v208, %v1019
  %v1021 = vpop.f32.mrf.mxu0
  %1022 = vmatprep.mubr.bf16.mxu0 0
  %1023 = vmatmul.mubr.bf16.gmra.mxu0 %v581
  %v1024 = vpop.f32.mrf.mxu0
  %v1025 = vadd.f32 %v208, %v1024
  %v1026 = vpop.f32.mrf.mxu0
  %v1027 = vpop.f32.mrf.mxu0
  %v1028 = vadd.f32 %v208, %v1027
  %v1029 = vpop.f32.mrf.mxu0
  %1030 = vmatprep.mubr.bf16.mxu0 0
  %1031 = vmatmul.mubr.bf16.gmra.mxu0 %v582
  %v1032 = vpop.f32.mrf.mxu0
  %v1033 = vadd.f32 %v208, %v1032
  %v1034 = vpop.f32.mrf.mxu0
  %v1035 = vpop.f32.mrf.mxu0
  %v1036 = vadd.f32 %v208, %v1035
  %v1037 = vpop.f32.mrf.mxu0
  %1038 = vmatprep.mubr.bf16.mxu0 0
  %1039 = vmatmul.mubr.bf16.gmra.mxu0 %v583
  %v1040 = vpop.f32.mrf.mxu0
  %v1041 = vadd.f32 %v208, %v1040
  %v1042 = vpop.f32.mrf.mxu0
  %v1043 = vpop.f32.mrf.mxu0
  %v1044 = vadd.f32 %v208, %v1043
  %v1045 = vpop.f32.mrf.mxu0
  %1046 = vmatprep.mubr.bf16.mxu0 0
  %1047 = vmatmul.mubr.bf16.gmra.mxu0 %v584
  %v1048 = vpop.f32.mrf.mxu0
  %v1049 = vadd.f32 %v208, %v1048
  %v1050 = vpop.f32.mrf.mxu0
  %v1051 = vpop.f32.mrf.mxu0
  %v1052 = vadd.f32 %v208, %v1051
  %v1053 = vpop.f32.mrf.mxu0
  %1054 = vmatprep.mubr.bf16.mxu0 0
  %1055 = vmatmul.mubr.bf16.gmra.mxu0 %v585
  %v1056 = vpop.f32.mrf.mxu0
  %v1057 = vadd.f32 %v208, %v1056
  %v1058 = vpop.f32.mrf.mxu0
  %v1059 = vpop.f32.mrf.mxu0
  %v1060 = vadd.f32 %v208, %v1059
  %v1061 = vpop.f32.mrf.mxu0
  %1062 = vmatprep.mubr.bf16.mxu0 0
  %1063 = vmatmul.mubr.bf16.gmra.mxu0 %v586
  %v1064 = vpop.f32.mrf.mxu0
  %v1065 = vadd.f32 %v208, %v1064
  %v1066 = vpop.f32.mrf.mxu0
  %v1067 = vpop.f32.mrf.mxu0
  %v1068 = vadd.f32 %v208, %v1067
  %v1069 = vpop.f32.mrf.mxu0
  %1070 = vmatprep.mubr.bf16.mxu0 0
  %1071 = vmatmul.mubr.bf16.gmra.mxu0 %v587
  %v1072 = vpop.f32.mrf.mxu0
  %v1073 = vadd.f32 %v208, %v1072
  %v1074 = vpop.f32.mrf.mxu0
  %v1075 = vpop.f32.mrf.mxu0
  %v1076 = vadd.f32 %v208, %v1075
  %v1077 = vpop.f32.mrf.mxu0
  %1078 = vmatprep.mubr.bf16.mxu0 0
  %1079 = vmatmul.mubr.bf16.gmra.mxu0 %v588
  %v1080 = vpop.f32.mrf.mxu0
  %v1081 = vadd.f32 %v208, %v1080
  %v1082 = vpop.f32.mrf.mxu0
  %v1083 = vpop.f32.mrf.mxu0
  %v1084 = vadd.f32 %v208, %v1083
  %v1085 = vpop.f32.mrf.mxu0
  %1086 = vmatprep.mubr.bf16.mxu0 0
  %1087 = vmatmul.mubr.bf16.gmra.mxu0 %v589
  %v1088 = vpop.f32.mrf.mxu0
  %v1089 = vadd.f32 %v208, %v1088
  %v1090 = vpop.f32.mrf.mxu0
  %v1091 = vpop.f32.mrf.mxu0
  %v1092 = vadd.f32 %v208, %v1091
  %v1093 = vpop.f32.mrf.mxu0
  %1094 = vmatprep.mubr.bf16.mxu0 0
  %1095 = vmatmul.mubr.bf16.gmra.mxu0 %v590
  %v1096 = vpop.f32.mrf.mxu0
  %v1097 = vadd.f32 %v208, %v1096
  %v1098 = vpop.f32.mrf.mxu0
  %v1099 = vpop.f32.mrf.mxu0
  %v1100 = vadd.f32 %v208, %v1099
  %v1101 = vpop.f32.mrf.mxu0
  %1102 = vmatprep.mubr.bf16.mxu0 0
  %1103 = vmatmul.mubr.bf16.gmra.mxu0 %v591
  %v1104 = vpop.f32.mrf.mxu0
  %v1105 = vadd.f32 %v208, %v1104
  %v1106 = vpop.f32.mrf.mxu0
  %v1107 = vpop.f32.mrf.mxu0
  %v1108 = vadd.f32 %v208, %v1107
  %v1109 = vpop.f32.mrf.mxu0
  %1110 = vmatprep.mubr.bf16.mxu0 0
  %1111 = vmatmul.mubr.bf16.gmra.mxu0 %v592
  %v1112 = vpop.f32.mrf.mxu0
  %v1113 = vadd.f32 %v208, %v1112
  %v1114 = vpop.f32.mrf.mxu0
  %v1115 = vpop.f32.mrf.mxu0
  %v1116 = vadd.f32 %v208, %v1115
  %v1117 = vpop.f32.mrf.mxu0
  %1118 = vmatprep.mubr.bf16.mxu0 0
  %1119 = vmatmul.mubr.bf16.gmra.mxu0 %v593
  %v1120 = vpop.f32.mrf.mxu0
  %v1121 = vadd.f32 %v208, %v1120
  %v1122 = vpop.f32.mrf.mxu0
  %v1123 = vpop.f32.mrf.mxu0
  %v1124 = vadd.f32 %v208, %v1123
  %v1125 = vpop.f32.mrf.mxu0
  %1126 = vmatprep.mubr.bf16.mxu0 0
  %1127 = vmatmul.mubr.bf16.gmra.mxu0 %v594
  %v1128 = vpop.f32.mrf.mxu0
  %v1129 = vadd.f32 %v208, %v1128
  %v1130 = vpop.f32.mrf.mxu0
  %v1131 = vpop.f32.mrf.mxu0
  %v1132 = vadd.f32 %v208, %v1131
  %v1133 = vpop.f32.mrf.mxu0
  %1134 = vmatprep.mubr.bf16.mxu0 0
  %1135 = vmatmul.mubr.bf16.gmra.mxu0 %v595
  %v1136 = vpop.f32.mrf.mxu0
  %v1137 = vadd.f32 %v208, %v1136
  %v1138 = vpop.f32.mrf.mxu0
  %v1139 = vpop.f32.mrf.mxu0
  %v1140 = vadd.f32 %v208, %v1139
  %v1141 = vpop.f32.mrf.mxu0
  %1142 = vmatprep.mubr.bf16.mxu0 0
  %1143 = vmatmul.mubr.bf16.gmra.mxu0 %v596
  %v1144 = vpop.f32.mrf.mxu0
  %v1145 = vadd.f32 %v208, %v1144
  %v1146 = vpop.f32.mrf.mxu0
  %v1147 = vpop.f32.mrf.mxu0
  %v1148 = vadd.f32 %v208, %v1147
  %v1149 = vpop.f32.mrf.mxu0
  %1150 = vmatprep.mubr.bf16.mxu0 0
  %1151 = vmatmul.mubr.bf16.gmra.mxu0 %v597
  %v1152 = vpop.f32.mrf.mxu0
  %v1153 = vadd.f32 %v208, %v1152
  %v1154 = vpop.f32.mrf.mxu0
  %v1155 = vpop.f32.mrf.mxu0
  %v1156 = vadd.f32 %v208, %v1155
  %v1157 = vpop.f32.mrf.mxu0
  %1158 = vmatprep.mubr.bf16.mxu0 0
  %1159 = vmatmul.mubr.bf16.gmra.mxu0 %v598
  %v1160 = vpop.f32.mrf.mxu0
  %v1161 = vadd.f32 %v208, %v1160
  %v1162 = vpop.f32.mrf.mxu0
  %v1163 = vpop.f32.mrf.mxu0
  %v1164 = vadd.f32 %v208, %v1163
  %v1165 = vpop.f32.mrf.mxu0
  %1166 = vmatprep.mubr.bf16.mxu0 0
  %1167 = vmatmul.mubr.bf16.gmra.mxu0 %v599
  %v1168 = vpop.f32.mrf.mxu0
  %v1169 = vadd.f32 %v208, %v1168
  %v1170 = vpop.f32.mrf.mxu0
  %v1171 = vpop.f32.mrf.mxu0
  %v1172 = vadd.f32 %v208, %v1171
  %v1173 = vpop.f32.mrf.mxu0
  %1174 = vmatprep.mubr.bf16.mxu0 0
  %1175 = vmatmul.mubr.bf16.gmra.mxu0 %v600
  %v1176 = vpop.f32.mrf.mxu0
  %v1177 = vadd.f32 %v208, %v1176
  %v1178 = vpop.f32.mrf.mxu0
  %v1179 = vpop.f32.mrf.mxu0
  %v1180 = vadd.f32 %v208, %v1179
  %v1181 = vpop.f32.mrf.mxu0
  %1182 = vmatprep.mubr.bf16.mxu0 0
  %1183 = vmatmul.mubr.bf16.gmra.mxu0 %v601
  %v1184 = vpop.f32.mrf.mxu0
  %v1185 = vadd.f32 %v208, %v1184
  %v1186 = vpop.f32.mrf.mxu0
  %v1187 = vpop.f32.mrf.mxu0
  %v1188 = vadd.f32 %v208, %v1187
  %v1189 = vpop.f32.mrf.mxu0
  %1190 = vmatprep.mubr.bf16.mxu0 0
  %1191 = vmatmul.mubr.bf16.gmra.mxu0 %v602
  %v1192 = vpop.f32.mrf.mxu0
  %v1193 = vadd.f32 %v208, %v1192
  %v1194 = vpop.f32.mrf.mxu0
  %v1195 = vpop.f32.mrf.mxu0
  %v1196 = vadd.f32 %v208, %v1195
  %v1197 = vpop.f32.mrf.mxu0
  %1198 = vmatprep.mubr.bf16.mxu0 0
  %1199 = vmatmul.mubr.bf16.gmra.mxu0 %v603
  %v1200 = vpop.f32.mrf.mxu0
  %v1201 = vadd.f32 %v208, %v1200
  %v1202 = vpop.f32.mrf.mxu0
  %v1203 = vpop.f32.mrf.mxu0
  %v1204 = vadd.f32 %v208, %v1203
  %v1205 = vpop.f32.mrf.mxu0
  %1206 = vmatprep.mubr.bf16.mxu0 0
  %1207 = vmatmul.mubr.bf16.gmra.mxu0 %v604
  %v1208 = vpop.f32.mrf.mxu0
  %v1209 = vadd.f32 %v208, %v1208
  %v1210 = vpop.f32.mrf.mxu0
  %v1211 = vpop.f32.mrf.mxu0
  %v1212 = vadd.f32 %v208, %v1211
  %v1213 = vpop.f32.mrf.mxu0
  %1214 = vmatprep.mubr.bf16.mxu0 0
  %1215 = vmatmul.mubr.bf16.gmra.mxu0 %v605
  %v1216 = vpop.f32.mrf.mxu0
  %v1217 = vadd.f32 %v208, %v1216
  %v1218 = vpop.f32.mrf.mxu0
  %v1219 = vpop.f32.mrf.mxu0
  %v1220 = vadd.f32 %v208, %v1219
  %v1221 = vpop.f32.mrf.mxu0
  %1222 = vmatprep.mubr.bf16.mxu0 0
  %1223 = vmatmul.mubr.bf16.gmra.mxu0 %v606
  %v1224 = vpop.f32.mrf.mxu0
  %v1225 = vadd.f32 %v208, %v1224
  %v1226 = vpop.f32.mrf.mxu0
  %v1227 = vpop.f32.mrf.mxu0
  %v1228 = vadd.f32 %v208, %v1227
  %v1229 = vpop.f32.mrf.mxu0
  %1230 = vmatprep.mubr.bf16.mxu0 0
  %1231 = vmatmul.mubr.bf16.gmra.mxu0 %v607
  %v1232 = vpop.f32.mrf.mxu0
  %v1233 = vadd.f32 %v208, %v1232
  %v1234 = vpop.f32.mrf.mxu0
  %v1235 = vpop.f32.mrf.mxu0
  %v1236 = vadd.f32 %v208, %v1235
  %v1237 = vpop.f32.mrf.mxu0
  %1238 = vmatprep.mubr.bf16.mxu0 0
  %1239 = vmatmul.mubr.bf16.gmra.mxu0 %v608
  %v1240 = vpop.f32.mrf.mxu0
  %v1241 = vadd.f32 %v208, %v1240
  %v1242 = vpop.f32.mrf.mxu0
  %v1243 = vpop.f32.mrf.mxu0
  %v1244 = vadd.f32 %v208, %v1243
  %v1245 = vpop.f32.mrf.mxu0
  %1246 = vmatprep.mubr.bf16.mxu0 0
  %1247 = vmatmul.mubr.bf16.gmra.mxu0 %v609
  %v1248 = vpop.f32.mrf.mxu0
  %v1249 = vadd.f32 %v208, %v1248
  %v1250 = vpop.f32.mrf.mxu0
  %v1251 = vpop.f32.mrf.mxu0
  %v1252 = vadd.f32 %v208, %v1251
  %v1253 = vpop.f32.mrf.mxu0
  %1254 = vmatprep.mubr.bf16.mxu0 0
  %1255 = vmatmul.mubr.bf16.gmra.mxu0 %v610
  %v1256 = vpop.f32.mrf.mxu0
  %v1257 = vadd.f32 %v208, %v1256
  %v1258 = vpop.f32.mrf.mxu0
  %v1259 = vpop.f32.mrf.mxu0
  %v1260 = vadd.f32 %v208, %v1259
  %v1261 = vpop.f32.mrf.mxu0
  %1262 = vmatprep.mubr.bf16.mxu0 0
  %1263 = vmatmul.mubr.bf16.gmra.mxu0 %v611
  %v1264 = vpop.f32.mrf.mxu0
  %v1265 = vadd.f32 %v208, %v1264
  %v1266 = vpop.f32.mrf.mxu0
  %v1267 = vpop.f32.mrf.mxu0
  %v1268 = vadd.f32 %v208, %v1267
  %v1269 = vpop.f32.mrf.mxu0
  %1270 = vmatprep.mubr.bf16.mxu0 0
  %1271 = vmatmul.mubr.bf16.gmra.mxu0 %v612
  %v1272 = vpop.f32.mrf.mxu0
  %v1273 = vadd.f32 %v208, %v1272
  %v1274 = vpop.f32.mrf.mxu0
  %v1275 = vpop.f32.mrf.mxu0
  %v1276 = vadd.f32 %v208, %v1275
  %v1277 = vpop.f32.mrf.mxu0
  %1278 = vmatprep.mubr.bf16.mxu0 0
  %1279 = vmatmul.mubr.bf16.gmra.mxu0 %v613
  %v1280 = vpop.f32.mrf.mxu0
  %v1281 = vadd.f32 %v208, %v1280
  %v1282 = vpop.f32.mrf.mxu0
  %v1283 = vpop.f32.mrf.mxu0
  %v1284 = vadd.f32 %v208, %v1283
  %v1285 = vpop.f32.mrf.mxu0
  %1286 = vmatprep.mubr.bf16.mxu0 0
  %1287 = vmatmul.mubr.bf16.gmra.mxu0 %v614
  %v1288 = vpop.f32.mrf.mxu0
  %v1289 = vadd.f32 %v208, %v1288
  %v1290 = vpop.f32.mrf.mxu0
  %v1291 = vpop.f32.mrf.mxu0
  %v1292 = vadd.f32 %v208, %v1291
  %v1293 = vpop.f32.mrf.mxu0
  %1294 = vmatprep.mubr.bf16.mxu0 0
  %1295 = vmatmul.mubr.bf16.gmra.mxu0 %v615
  %v1296 = vpop.f32.mrf.mxu0
  %v1297 = vadd.f32 %v208, %v1296
  %v1298 = vpop.f32.mrf.mxu0
  %v1299 = vpop.f32.mrf.mxu0
  %v1300 = vadd.f32 %v208, %v1299
  %v1301 = vpop.f32.mrf.mxu0
  %1302 = vmatprep.mubr.bf16.mxu0 0
  %1303 = vmatmul.mubr.bf16.gmra.mxu0 %v616
  %v1304 = vpop.f32.mrf.mxu0
  %v1305 = vadd.f32 %v208, %v1304
  %v1306 = vpop.f32.mrf.mxu0
  %v1307 = vpop.f32.mrf.mxu0
  %v1308 = vadd.f32 %v208, %v1307
  %v1309 = vpop.f32.mrf.mxu0
  %1310 = vmatprep.mubr.bf16.mxu0 0
  %1311 = vmatmul.mubr.bf16.gmra.mxu0 %v617
  %v1312 = vpop.f32.mrf.mxu0
  %v1313 = vadd.f32 %v208, %v1312
  %v1314 = vpop.f32.mrf.mxu0
  %v1315 = vpop.f32.mrf.mxu0
  %v1316 = vadd.f32 %v208, %v1315
  %v1317 = vpop.f32.mrf.mxu0
  %1318 = vmatprep.mubr.bf16.mxu0 0
  %1319 = vmatmul.mubr.bf16.gmra.mxu0 %v618
  %v1320 = vpop.f32.mrf.mxu0
  %v1321 = vadd.f32 %v208, %v1320
  %v1322 = vpop.f32.mrf.mxu0
  %v1323 = vpop.f32.mrf.mxu0
  %v1324 = vadd.f32 %v208, %v1323
  %v1325 = vpop.f32.mrf.mxu0
  %1326 = vmatprep.mubr.bf16.mxu0 0
  %1327 = vmatmul.mubr.bf16.gmra.mxu0 %v619
  %v1328 = vpop.f32.mrf.mxu0
  %v1329 = vadd.f32 %v208, %v1328
  %v1330 = vpop.f32.mrf.mxu0
  %v1331 = vpop.f32.mrf.mxu0
  %v1332 = vadd.f32 %v208, %v1331
  %v1333 = vpop.f32.mrf.mxu0
  %1334 = vmatprep.mubr.bf16.mxu0 0
  %1335 = vmatmul.mubr.bf16.gmra.mxu0 %v620
  %v1336 = vpop.f32.mrf.mxu0
  %v1337 = vadd.f32 %v208, %v1336
  %v1338 = vpop.f32.mrf.mxu0
  %v1339 = vpop.f32.mrf.mxu0
  %v1340 = vadd.f32 %v208, %v1339
  %v1341 = vpop.f32.mrf.mxu0
  %1342 = vmatprep.mubr.bf16.mxu0 0
  %1343 = vmatmul.mubr.bf16.gmra.mxu0 %v621
  %v1344 = vpop.f32.mrf.mxu0
  %v1345 = vadd.f32 %v208, %v1344
  %v1346 = vpop.f32.mrf.mxu0
  %v1347 = vpop.f32.mrf.mxu0
  %v1348 = vadd.f32 %v208, %v1347
  %v1349 = vpop.f32.mrf.mxu0
  %1350 = vmatprep.mubr.bf16.mxu0 0
  %1351 = vmatmul.mubr.bf16.gmra.mxu0 %v622
  %v1352 = vpop.f32.mrf.mxu0
  %v1353 = vadd.f32 %v208, %v1352
  %v1354 = vpop.f32.mrf.mxu0
  %v1355 = vpop.f32.mrf.mxu0
  %v1356 = vadd.f32 %v208, %v1355
  %v1357 = vpop.f32.mrf.mxu0
  %1358 = vmatprep.mubr.bf16.mxu0 0
  %1359 = vmatmul.mubr.bf16.gmra.mxu0 %v623
  %v1360 = vpop.f32.mrf.mxu0
  %v1361 = vadd.f32 %v208, %v1360
  %v1362 = vpop.f32.mrf.mxu0
  %v1363 = vpop.f32.mrf.mxu0
  %v1364 = vadd.f32 %v208, %v1363
  %v1365 = vpop.f32.mrf.mxu0
  %1366 = vmatprep.mubr.bf16.mxu0 0
  %1367 = vmatmul.mubr.bf16.gmra.mxu0 %v624
  %v1368 = vpop.f32.mrf.mxu0
  %v1369 = vadd.f32 %v208, %v1368
  %v1370 = vpop.f32.mrf.mxu0
  %v1371 = vpop.f32.mrf.mxu0
  %v1372 = vadd.f32 %v208, %v1371
  %v1373 = vpop.f32.mrf.mxu0
  %1374 = vmatprep.mubr.bf16.mxu0 0
  %1375 = vmatmul.mubr.bf16.gmra.mxu0 %v625
  %v1376 = vpop.f32.mrf.mxu0
  %v1377 = vadd.f32 %v208, %v1376
  %v1378 = vpop.f32.mrf.mxu0
  %v1379 = vpop.f32.mrf.mxu0
  %v1380 = vadd.f32 %v208, %v1379
  %v1381 = vpop.f32.mrf.mxu0
  %1382 = vmatprep.mubr.bf16.mxu0 0
  %1383 = vmatmul.mubr.bf16.gmra.mxu0 %v626
  %v1384 = vpop.f32.mrf.mxu0
  %v1385 = vadd.f32 %v208, %v1384
  %v1386 = vpop.f32.mrf.mxu0
  %v1387 = vpop.f32.mrf.mxu0
  %v1388 = vadd.f32 %v208, %v1387
  %v1389 = vpop.f32.mrf.mxu0
  %1390 = vmatprep.mubr.bf16.mxu0 0
  %1391 = vmatmul.mubr.bf16.gmra.mxu0 %v627
  %v1392 = vpop.f32.mrf.mxu0
  %v1393 = vadd.f32 %v208, %v1392
  %v1394 = vpop.f32.mrf.mxu0
  %v1395 = vpop.f32.mrf.mxu0
  %v1396 = vadd.f32 %v208, %v1395
  %v1397 = vpop.f32.mrf.mxu0
  %1398 = vmatprep.mubr.bf16.mxu0 0
  %1399 = vmatmul.mubr.bf16.gmra.mxu0 %v628
  %v1400 = vpop.f32.mrf.mxu0
  %v1401 = vadd.f32 %v208, %v1400
  %v1402 = vpop.f32.mrf.mxu0
  %v1403 = vpop.f32.mrf.mxu0
  %v1404 = vadd.f32 %v208, %v1403
  %v1405 = vpop.f32.mrf.mxu0
  %1406 = vmatprep.mubr.bf16.mxu0 0
  %1407 = vmatmul.mubr.bf16.gmra.mxu0 %v629
  %v1408 = vpop.f32.mrf.mxu0
  %v1409 = vadd.f32 %v208, %v1408
  %v1410 = vpop.f32.mrf.mxu0
  %v1411 = vpop.f32.mrf.mxu0
  %v1412 = vadd.f32 %v208, %v1411
  %v1413 = vpop.f32.mrf.mxu0
  %1414 = vmatprep.mubr.bf16.mxu0 0
  %1415 = vmatmul.mubr.bf16.gmra.mxu0 %v630
  %v1416 = vpop.f32.mrf.mxu0
  %v1417 = vadd.f32 %v208, %v1416
  %v1418 = vpop.f32.mrf.mxu0
  %v1419 = vpop.f32.mrf.mxu0
  %v1420 = vadd.f32 %v208, %v1419
  %v1421 = vpop.f32.mrf.mxu0
  %1422 = vmatprep.mubr.bf16.mxu0 0
  %1423 = vmatmul.mubr.bf16.gmra.mxu0 %v631
  %v1424 = vpop.f32.mrf.mxu0
  %v1425 = vadd.f32 %v208, %v1424
  %v1426 = vpop.f32.mrf.mxu0
  %v1427 = vpop.f32.mrf.mxu0
  %v1428 = vadd.f32 %v208, %v1427
  %v1429 = vpop.f32.mrf.mxu0
  %1430 = vmatprep.mubr.bf16.mxu0 0
  %1431 = vmatmul.mubr.bf16.gmra.mxu0 %v632
  %v1432 = vpop.f32.mrf.mxu0
  %v1433 = vadd.f32 %v208, %v1432
  %v1434 = vpop.f32.mrf.mxu0
  %v1435 = vpop.f32.mrf.mxu0
  %v1436 = vadd.f32 %v208, %v1435
  %v1437 = vpop.f32.mrf.mxu0
  %1438 = vmatprep.mubr.bf16.mxu0 0
  %1439 = vmatmul.mubr.bf16.gmra.mxu0 %v633
  %v1440 = vpop.f32.mrf.mxu0
  %v1441 = vadd.f32 %v208, %v1440
  %v1442 = vpop.f32.mrf.mxu0
  %v1443 = vpop.f32.mrf.mxu0
  %v1444 = vadd.f32 %v208, %v1443
  %v1445 = vpop.f32.mrf.mxu0
  %1446 = vmatprep.mubr.bf16.mxu0 0
  %1447 = vmatmul.mubr.bf16.gmra.mxu0 %v634
  %v1448 = vpop.f32.mrf.mxu0
  %v1449 = vadd.f32 %v208, %v1448
  %v1450 = vpop.f32.mrf.mxu0
  %v1451 = vpop.f32.mrf.mxu0
  %v1452 = vadd.f32 %v208, %v1451
  %v1453 = vpop.f32.mrf.mxu0
  %1454 = vmatprep.mubr.bf16.mxu0 0
  %1455 = vmatmul.mubr.bf16.gmra.mxu0 %v635
  %v1456 = vpop.f32.mrf.mxu0
  %v1457 = vadd.f32 %v208, %v1456
  %v1458 = vpop.f32.mrf.mxu0
  %v1459 = vpop.f32.mrf.mxu0
  %v1460 = vadd.f32 %v208, %v1459
  %v1461 = vpop.f32.mrf.mxu0
  %1462 = vmatprep.mubr.bf16.mxu0 0
  %1463 = vmatmul.mubr.bf16.gmra.mxu0 %v636
  %v1464 = vpop.f32.mrf.mxu0
  %v1465 = vadd.f32 %v208, %v1464
  %v1466 = vpop.f32.mrf.mxu0
  %v1467 = vpop.f32.mrf.mxu0
  %v1468 = vadd.f32 %v208, %v1467
  %v1469 = vpop.f32.mrf.mxu0
  %1470 = vmatprep.mubr.bf16.mxu0 0
  %1471 = vmatmul.mubr.bf16.gmra.mxu0 %v637
  %v1472 = vpop.f32.mrf.mxu0
  %v1473 = vadd.f32 %v208, %v1472
  %v1474 = vpop.f32.mrf.mxu0
  %v1475 = vpop.f32.mrf.mxu0
  %v1476 = vadd.f32 %v208, %v1475
  %v1477 = vpop.f32.mrf.mxu0
  %1478 = vmatprep.mubr.bf16.mxu0 0
  %1479 = vmatmul.mubr.bf16.gmra.mxu0 %v638
  %v1480 = vpop.f32.mrf.mxu0
  %v1481 = vadd.f32 %v208, %v1480
  %v1482 = vpop.f32.mrf.mxu0
  %v1483 = vpop.f32.mrf.mxu0
  %v1484 = vadd.f32 %v208, %v1483
  %v1485 = vpop.f32.mrf.mxu0
  %1486 = vmatprep.mubr.bf16.mxu0 0
  %1487 = vmatmul.mubr.bf16.gmra.mxu0 %v639
  %v1488 = vpop.f32.mrf.mxu0
  %v1489 = vadd.f32 %v208, %v1488
  %v1490 = vpop.f32.mrf.mxu0
  %v1491 = vpop.f32.mrf.mxu0
  %v1492 = vadd.f32 %v208, %v1491
  %v1493 = vpop.f32.mrf.mxu0
  %1494 = vdwg.mxu0
  %v1495 = vmax.f32 %v809, 0.0
  %v1496 = vmax.f32 %v812, 0.0
  %v1497 = vmax.f32 %v817, 0.0
  %v1498 = vmax.f32 %v820, 0.0
  %v1499 = vmax.f32 %v825, 0.0
  %v1500 = vmax.f32 %v828, 0.0
  %v1501 = vmax.f32 %v833, 0.0
  %v1502 = vmax.f32 %v836, 0.0
  %v1503 = vmax.f32 %v841, 0.0
  %v1504 = vmax.f32 %v844, 0.0
  %v1505 = vmax.f32 %v849, 0.0
  %v1506 = vmax.f32 %v852, 0.0
  %v1507 = vmax.f32 %v857, 0.0
  %v1508 = vmax.f32 %v860, 0.0
  %v1509 = vmax.f32 %v865, 0.0
  %v1510 = vmax.f32 %v868, 0.0
  %v1511 = vmax.f32 %v873, 0.0
  %v1512 = vmax.f32 %v876, 0.0
  %v1513 = vmax.f32 %v881, 0.0
  %v1514 = vmax.f32 %v884, 0.0
  %v1515 = vmax.f32 %v889, 0.0
  %v1516 = vmax.f32 %v892, 0.0
  %v1517 = vmax.f32 %v897, 0.0
  %v1518 = vmax.f32 %v900, 0.0
  %v1519 = vmax.f32 %v905, 0.0
  %v1520 = vmax.f32 %v908, 0.0
  %v1521 = vmax.f32 %v913, 0.0
  %v1522 = vmax.f32 %v916, 0.0
  %v1523 = vmax.f32 %v921, 0.0
  %v1524 = vmax.f32 %v924, 0.0
  %v1525 = vmax.f32 %v929, 0.0
  %v1526 = vmax.f32 %v932, 0.0
  %v1527 = vmax.f32 %v937, 0.0
  %v1528 = vmax.f32 %v940, 0.0
  %v1529 = vmax.f32 %v945, 0.0
  %v1530 = vmax.f32 %v948, 0.0
  %v1531 = vmax.f32 %v953, 0.0
  %v1532 = vmax.f32 %v956, 0.0
  %v1533 = vmax.f32 %v961, 0.0
  %v1534 = vmax.f32 %v964, 0.0
  %v1535 = vmax.f32 %v969, 0.0
  %v1536 = vmax.f32 %v972, 0.0
  %v1537 = vmax.f32 %v977, 0.0
  %v1538 = vmax.f32 %v980, 0.0
  %v1539 = vmax.f32 %v985, 0.0
  %v1540 = vmax.f32 %v988, 0.0
  %v1541 = vmax.f32 %v993, 0.0
  %v1542 = vmax.f32 %v996, 0.0
  %v1543 = vmax.f32 %v1001, 0.0
  %v1544 = vmax.f32 %v1004, 0.0
  %v1545 = vmax.f32 %v1009, 0.0
  %v1546 = vmax.f32 %v1012, 0.0
  %v1547 = vmax.f32 %v1017, 0.0
  %v1548 = vmax.f32 %v1020, 0.0
  %v1549 = vmax.f32 %v1025, 0.0
  %v1550 = vmax.f32 %v1028, 0.0
  %v1551 = vmax.f32 %v1033, 0.0
  %v1552 = vmax.f32 %v1036, 0.0
  %v1553 = vmax.f32 %v1041, 0.0
  %v1554 = vmax.f32 %v1044, 0.0
  %v1555 = vmax.f32 %v1049, 0.0
  %v1556 = vmax.f32 %v1052, 0.0
  %v1557 = vmax.f32 %v1057, 0.0
  %v1558 = vmax.f32 %v1060, 0.0
  %v1559 = vmax.f32 %v1065, 0.0
  %v1560 = vmax.f32 %v1068, 0.0
  %v1561 = vmax.f32 %v1073, 0.0
  %v1562 = vmax.f32 %v1076, 0.0
  %v1563 = vmax.f32 %v1081, 0.0
  %v1564 = vmax.f32 %v1084, 0.0
  %v1565 = vmax.f32 %v1089, 0.0
  %v1566 = vmax.f32 %v1092, 0.0
  %v1567 = vmax.f32 %v1097, 0.0
  %v1568 = vmax.f32 %v1100, 0.0
  %v1569 = vmax.f32 %v1105, 0.0
  %v1570 = vmax.f32 %v1108, 0.0
  %v1571 = vmax.f32 %v1113, 0.0
  %v1572 = vmax.f32 %v1116, 0.0
  %v1573 = vmax.f32 %v1121, 0.0
  %v1574 = vmax.f32 %v1124, 0.0
  %v1575 = vmax.f32 %v1129, 0.0
  %v1576 = vmax.f32 %v1132, 0.0
  %v1577 = vmax.f32 %v1137, 0.0
  %v1578 = vmax.f32 %v1140, 0.0
  %v1579 = vmax.f32 %v1145, 0.0
  %v1580 = vmax.f32 %v1148, 0.0
  %v1581 = vmax.f32 %v1153, 0.0
  %v1582 = vmax.f32 %v1156, 0.0
  %v1583 = vmax.f32 %v1161, 0.0
  %v1584 = vmax.f32 %v1164, 0.0
  %v1585 = vmax.f32 %v1169, 0.0
  %v1586 = vmax.f32 %v1172, 0.0
  %v1587 = vmax.f32 %v1177, 0.0
  %v1588 = vmax.f32 %v1180, 0.0
  %v1589 = vmax.f32 %v1185, 0.0
  %v1590 = vmax.f32 %v1188, 0.0
  %v1591 = vmax.f32 %v1193, 0.0
  %v1592 = vmax.f32 %v1196, 0.0
  %v1593 = vmax.f32 %v1201, 0.0
  %v1594 = vmax.f32 %v1204, 0.0
  %v1595 = vmax.f32 %v1209, 0.0
  %v1596 = vmax.f32 %v1212, 0.0
  %v1597 = vmax.f32 %v1217, 0.0
  %v1598 = vmax.f32 %v1220, 0.0
  %v1599 = vmax.f32 %v1225, 0.0
  %v1600 = vmax.f32 %v1228, 0.0
  %v1601 = vmax.f32 %v1233, 0.0
  %v1602 = vmax.f32 %v1236, 0.0
  %v1603 = vmax.f32 %v1241, 0.0
  %v1604 = vmax.f32 %v1244, 0.0
  %v1605 = vmax.f32 %v1249, 0.0
  %v1606 = vmax.f32 %v1252, 0.0
  %v1607 = vmax.f32 %v1257, 0.0
  %v1608 = vmax.f32 %v1260, 0.0
  %v1609 = vmax.f32 %v1265, 0.0
  %v1610 = vmax.f32 %v1268, 0.0
  %v1611 = vmax.f32 %v1273, 0.0
  %v1612 = vmax.f32 %v1276, 0.0
  %v1613 = vmax.f32 %v1281, 0.0
  %v1614 = vmax.f32 %v1284, 0.0
  %v1615 = vmax.f32 %v1289, 0.0
  %v1616 = vmax.f32 %v1292, 0.0
  %v1617 = vmax.f32 %v1297, 0.0
  %v1618 = vmax.f32 %v1300, 0.0
  %v1619 = vmax.f32 %v1305, 0.0
  %v1620 = vmax.f32 %v1308, 0.0
  %v1621 = vmax.f32 %v1313, 0.0
  %v1622 = vmax.f32 %v1316, 0.0
  %v1623 = vmax.f32 %v1321, 0.0
  %v1624 = vmax.f32 %v1324, 0.0
  %v1625 = vmax.f32 %v1329, 0.0
  %v1626 = vmax.f32 %v1332, 0.0
  %v1627 = vmax.f32 %v1337, 0.0
  %v1628 = vmax.f32 %v1340, 0.0
  %v1629 = vmax.f32 %v1345, 0.0
  %v1630 = vmax.f32 %v1348, 0.0
  %v1631 = vmax.f32 %v1353, 0.0
  %v1632 = vmax.f32 %v1356, 0.0
  %v1633 = vmax.f32 %v1361, 0.0
  %v1634 = vmax.f32 %v1364, 0.0
  %v1635 = vmax.f32 %v1369, 0.0
  %v1636 = vmax.f32 %v1372, 0.0
  %v1637 = vmax.f32 %v1377, 0.0
  %v1638 = vmax.f32 %v1380, 0.0
  %v1639 = vmax.f32 %v1385, 0.0
  %v1640 = vmax.f32 %v1388, 0.0
  %v1641 = vmax.f32 %v1393, 0.0
  %v1642 = vmax.f32 %v1396, 0.0
  %v1643 = vmax.f32 %v1401, 0.0
  %v1644 = vmax.f32 %v1404, 0.0
  %v1645 = vmax.f32 %v1409, 0.0
  %v1646 = vmax.f32 %v1412, 0.0
  %v1647 = vmax.f32 %v1417, 0.0
  %v1648 = vmax.f32 %v1420, 0.0
  %v1649 = vmax.f32 %v1425, 0.0
  %v1650 = vmax.f32 %v1428, 0.0
  %v1651 = vmax.f32 %v1433, 0.0
  %v1652 = vmax.f32 %v1436, 0.0
  %v1653 = vmax.f32 %v1441, 0.0
  %v1654 = vmax.f32 %v1444, 0.0
  %v1655 = vmax.f32 %v1449, 0.0
  %v1656 = vmax.f32 %v1452, 0.0
  %v1657 = vmax.f32 %v1457, 0.0
  %v1658 = vmax.f32 %v1460, 0.0
  %v1659 = vmax.f32 %v1465, 0.0
  %v1660 = vmax.f32 %v1468, 0.0
  %v1661 = vmax.f32 %v1473, 0.0
  %v1662 = vmax.f32 %v1476, 0.0
  %v1663 = vmax.f32 %v1481, 0.0
  %v1664 = vmax.f32 %v1484, 0.0
  %v1665 = vmax.f32 %v1489, 0.0
  %v1666 = vmax.f32 %v1492, 0.0
  %v1667 = vpack.c.bf16 %v1496, %v1495
  %v1668 = vpack.c.bf16 %v1498, %v1497
  %v1669 = vpack.c.bf16 %v1500, %v1499
  %v1670 = vpack.c.bf16 %v1502, %v1501
  %v1671 = vpack.c.bf16 %v1504, %v1503
  %v1672 = vpack.c.bf16 %v1506, %v1505
  %v1673 = vpack.c.bf16 %v1508, %v1507
  %v1674 = vpack.c.bf16 %v1510, %v1509
  %v1675 = vpack.c.bf16 %v1512, %v1511
  %v1676 = vpack.c.bf16 %v1514, %v1513
  %v1677 = vpack.c.bf16 %v1516, %v1515
  %v1678 = vpack.c.bf16 %v1518, %v1517
  %v1679 = vpack.c.bf16 %v1520, %v1519
  %v1680 = vpack.c.bf16 %v1522, %v1521
  %v1681 = vpack.c.bf16 %v1524, %v1523
  %v1682 = vpack.c.bf16 %v1526, %v1525
  %v1683 = vpack.c.bf16 %v1528, %v1527
  %v1684 = vpack.c.bf16 %v1530, %v1529
  %v1685 = vpack.c.bf16 %v1532, %v1531
  %v1686 = vpack.c.bf16 %v1534, %v1533
  %v1687 = vpack.c.bf16 %v1536, %v1535
  %v1688 = vpack.c.bf16 %v1538, %v1537
  %v1689 = vpack.c.bf16 %v1540, %v1539
  %v1690 = vpack.c.bf16 %v1542, %v1541
  %v1691 = vpack.c.bf16 %v1544, %v1543
  %v1692 = vpack.c.bf16 %v1546, %v1545
  %v1693 = vpack.c.bf16 %v1548, %v1547
  %v1694 = vpack.c.bf16 %v1550, %v1549
  %v1695 = vpack.c.bf16 %v1552, %v1551
  %v1696 = vpack.c.bf16 %v1554, %v1553
  %v1697 = vpack.c.bf16 %v1556, %v1555
  %v1698 = vpack.c.bf16 %v1558, %v1557
  %v1699 = vpack.c.bf16 %v1560, %v1559
  %v1700 = vpack.c.bf16 %v1562, %v1561
  %v1701 = vpack.c.bf16 %v1564, %v1563
  %v1702 = vpack.c.bf16 %v1566, %v1565
  %v1703 = vpack.c.bf16 %v1568, %v1567
  %v1704 = vpack.c.bf16 %v1570, %v1569
  %v1705 = vpack.c.bf16 %v1572, %v1571
  %v1706 = vpack.c.bf16 %v1574, %v1573
  %v1707 = vpack.c.bf16 %v1576, %v1575
  %v1708 = vpack.c.bf16 %v1578, %v1577
  %v1709 = vpack.c.bf16 %v1580, %v1579
  %v1710 = vpack.c.bf16 %v1582, %v1581
  %v1711 = vpack.c.bf16 %v1584, %v1583
  %v1712 = vpack.c.bf16 %v1586, %v1585
  %v1713 = vpack.c.bf16 %v1588, %v1587
  %v1714 = vpack.c.bf16 %v1590, %v1589
  %v1715 = vpack.c.bf16 %v1592, %v1591
  %v1716 = vpack.c.bf16 %v1594, %v1593
  %v1717 = vpack.c.bf16 %v1596, %v1595
  %v1718 = vpack.c.bf16 %v1598, %v1597
  %v1719 = vpack.c.bf16 %v1600, %v1599
  %v1720 = vpack.c.bf16 %v1602, %v1601
  %v1721 = vpack.c.bf16 %v1604, %v1603
  %v1722 = vpack.c.bf16 %v1606, %v1605
  %v1723 = vpack.c.bf16 %v1608, %v1607
  %v1724 = vpack.c.bf16 %v1610, %v1609
  %v1725 = vpack.c.bf16 %v1612, %v1611
  %v1726 = vpack.c.bf16 %v1614, %v1613
  %v1727 = vpack.c.bf16 %v1616, %v1615
  %v1728 = vpack.c.bf16 %v1618, %v1617
  %v1729 = vpack.c.bf16 %v1620, %v1619
  %v1730 = vpack.c.bf16 %v1622, %v1621
  %v1731 = vpack.c.bf16 %v1624, %v1623
  %v1732 = vpack.c.bf16 %v1626, %v1625
  %v1733 = vpack.c.bf16 %v1628, %v1627
  %v1734 = vpack.c.bf16 %v1630, %v1629
  %v1735 = vpack.c.bf16 %v1632, %v1631
  %v1736 = vpack.c.bf16 %v1634, %v1633
  %v1737 = vpack.c.bf16 %v1636, %v1635
  %v1738 = vpack.c.bf16 %v1638, %v1637
  %v1739 = vpack.c.bf16 %v1640, %v1639
  %v1740 = vpack.c.bf16 %v1642, %v1641
  %v1741 = vpack.c.bf16 %v1644, %v1643
  %v1742 = vpack.c.bf16 %v1646, %v1645
  %v1743 = vpack.c.bf16 %v1648, %v1647
  %v1744 = vpack.c.bf16 %v1650, %v1649
  %v1745 = vpack.c.bf16 %v1652, %v1651
  %v1746 = vpack.c.bf16 %v1654, %v1653
  %v1747 = vpack.c.bf16 %v1656, %v1655
  %v1748 = vpack.c.bf16 %v1658, %v1657
  %v1749 = vpack.c.bf16 %v1660, %v1659
  %v1750 = vpack.c.bf16 %v1662, %v1661
  %v1751 = vpack.c.bf16 %v1664, %v1663
  %v1752 = vpack.c.bf16 %v1666, %v1665
  %v1839 = vunpack.c.l.b16 %v1667
  %v1840 = vunpack.c.h.b16 %v1667
  %v1841 = vunpack.c.l.b16 %v1668
  %v1842 = vunpack.c.h.b16 %v1668
  %v1843 = vunpack.c.l.b16 %v1669
  %v1844 = vunpack.c.h.b16 %v1669
  %v1845 = vunpack.c.l.b16 %v1670
  %v1846 = vunpack.c.h.b16 %v1670
  %v1847 = vunpack.c.l.b16 %v1671
  %v1848 = vunpack.c.h.b16 %v1671
  %v1849 = vunpack.c.l.b16 %v1672
  %v1850 = vunpack.c.h.b16 %v1672
  %v1851 = vunpack.c.l.b16 %v1673
  %v1852 = vunpack.c.h.b16 %v1673
  %v1853 = vunpack.c.l.b16 %v1674
  %v1854 = vunpack.c.h.b16 %v1674
  %v1855 = vunpack.c.l.b16 %v1675
  %v1856 = vunpack.c.h.b16 %v1675
  %v1857 = vunpack.c.l.b16 %v1676
  %v1858 = vunpack.c.h.b16 %v1676
  %v1859 = vunpack.c.l.b16 %v1677
  %v1860 = vunpack.c.h.b16 %v1677
  %v1861 = vunpack.c.l.b16 %v1678
  %v1862 = vunpack.c.h.b16 %v1678
  %v1863 = vunpack.c.l.b16 %v1679
  %v1864 = vunpack.c.h.b16 %v1679
  %v1865 = vunpack.c.l.b16 %v1680
  %v1866 = vunpack.c.h.b16 %v1680
  %v1867 = vunpack.c.l.b16 %v1681
  %v1868 = vunpack.c.h.b16 %v1681
  %v1869 = vunpack.c.l.b16 %v1682
  %v1870 = vunpack.c.h.b16 %v1682
  %v1871 = vunpack.c.l.b16 %v1683
  %v1872 = vunpack.c.h.b16 %v1683
  %v1873 = vunpack.c.l.b16 %v1684
  %v1874 = vunpack.c.h.b16 %v1684
  %v1875 = vunpack.c.l.b16 %v1685
  %v1876 = vunpack.c.h.b16 %v1685
  %v1877 = vunpack.c.l.b16 %v1686
  %v1878 = vunpack.c.h.b16 %v1686
  %v1879 = vunpack.c.l.b16 %v1687
  %v1880 = vunpack.c.h.b16 %v1687
  %v1881 = vunpack.c.l.b16 %v1688
  %v1882 = vunpack.c.h.b16 %v1688
  %v1883 = vunpack.c.l.b16 %v1689
  %v1884 = vunpack.c.h.b16 %v1689
  %v1885 = vunpack.c.l.b16 %v1690
  %v1886 = vunpack.c.h.b16 %v1690
  %v1887 = vunpack.c.l.b16 %v1691
  %v1888 = vunpack.c.h.b16 %v1691
  %v1889 = vunpack.c.l.b16 %v1692
  %v1890 = vunpack.c.h.b16 %v1692
  %v1891 = vunpack.c.l.b16 %v1693
  %v1892 = vunpack.c.h.b16 %v1693
  %v1893 = vunpack.c.l.b16 %v1694
  %v1894 = vunpack.c.h.b16 %v1694
  %v1895 = vunpack.c.l.b16 %v1695
  %v1896 = vunpack.c.h.b16 %v1695
  %v1897 = vunpack.c.l.b16 %v1696
  %v1898 = vunpack.c.h.b16 %v1696
  %v1899 = vunpack.c.l.b16 %v1697
  %v1900 = vunpack.c.h.b16 %v1697
  %v1901 = vunpack.c.l.b16 %v1698
  %v1902 = vunpack.c.h.b16 %v1698
  %v1903 = vunpack.c.l.b16 %v1699
  %v1904 = vunpack.c.h.b16 %v1699
  %v1905 = vunpack.c.l.b16 %v1700
  %v1906 = vunpack.c.h.b16 %v1700
  %v1907 = vunpack.c.l.b16 %v1701
  %v1908 = vunpack.c.h.b16 %v1701
  %v1909 = vunpack.c.l.b16 %v1702
  %v1910 = vunpack.c.h.b16 %v1702
  %v1911 = vunpack.c.l.b16 %v1703
  %v1912 = vunpack.c.h.b16 %v1703
  %v1913 = vunpack.c.l.b16 %v1704
  %v1914 = vunpack.c.h.b16 %v1704
  %v1915 = vunpack.c.l.b16 %v1705
  %v1916 = vunpack.c.h.b16 %v1705
  %v1917 = vunpack.c.l.b16 %v1706
  %v1918 = vunpack.c.h.b16 %v1706
  %v1919 = vunpack.c.l.b16 %v1707
  %v1920 = vunpack.c.h.b16 %v1707
  %v1921 = vunpack.c.l.b16 %v1708
  %v1922 = vunpack.c.h.b16 %v1708
  %v1923 = vunpack.c.l.b16 %v1709
  %v1924 = vunpack.c.h.b16 %v1709
  %v1925 = vunpack.c.l.b16 %v1710
  %v1926 = vunpack.c.h.b16 %v1710
  %v1927 = vunpack.c.l.b16 %v1711
  %v1928 = vunpack.c.h.b16 %v1711
  %v1929 = vunpack.c.l.b16 %v1712
  %v1930 = vunpack.c.h.b16 %v1712
  %v1931 = vunpack.c.l.b16 %v1713
  %v1932 = vunpack.c.h.b16 %v1713
  %v1933 = vunpack.c.l.b16 %v1714
  %v1934 = vunpack.c.h.b16 %v1714
  %v1935 = vunpack.c.l.b16 %v1715
  %v1936 = vunpack.c.h.b16 %v1715
  %v1937 = vunpack.c.l.b16 %v1716
  %v1938 = vunpack.c.h.b16 %v1716
  %v1939 = vunpack.c.l.b16 %v1717
  %v1940 = vunpack.c.h.b16 %v1717
  %v1941 = vunpack.c.l.b16 %v1718
  %v1942 = vunpack.c.h.b16 %v1718
  %v1943 = vunpack.c.l.b16 %v1719
  %v1944 = vunpack.c.h.b16 %v1719
  %v1945 = vunpack.c.l.b16 %v1720
  %v1946 = vunpack.c.h.b16 %v1720
  %v1947 = vunpack.c.l.b16 %v1721
  %v1948 = vunpack.c.h.b16 %v1721
  %v1949 = vunpack.c.l.b16 %v1722
  %v1950 = vunpack.c.h.b16 %v1722
  %v1951 = vunpack.c.l.b16 %v1723
  %v1952 = vunpack.c.h.b16 %v1723
  %v1953 = vunpack.c.l.b16 %v1724
  %v1954 = vunpack.c.h.b16 %v1724
  %v1955 = vunpack.c.l.b16 %v1725
  %v1956 = vunpack.c.h.b16 %v1725
  %v1957 = vunpack.c.l.b16 %v1726
  %v1958 = vunpack.c.h.b16 %v1726
  %v1959 = vunpack.c.l.b16 %v1727
  %v1960 = vunpack.c.h.b16 %v1727
  %v1961 = vunpack.c.l.b16 %v1728
  %v1962 = vunpack.c.h.b16 %v1728
  %v1963 = vunpack.c.l.b16 %v1729
  %v1964 = vunpack.c.h.b16 %v1729
  %v1965 = vunpack.c.l.b16 %v1730
  %v1966 = vunpack.c.h.b16 %v1730
  %v1967 = vunpack.c.l.b16 %v1731
  %v1968 = vunpack.c.h.b16 %v1731
  %v1969 = vunpack.c.l.b16 %v1732
  %v1970 = vunpack.c.h.b16 %v1732
  %v1971 = vunpack.c.l.b16 %v1733
  %v1972 = vunpack.c.h.b16 %v1733
  %v1973 = vunpack.c.l.b16 %v1734
  %v1974 = vunpack.c.h.b16 %v1734
  %v1975 = vunpack.c.l.b16 %v1735
  %v1976 = vunpack.c.h.b16 %v1735
  %v1977 = vunpack.c.l.b16 %v1736
  %v1978 = vunpack.c.h.b16 %v1736
  %v1979 = vunpack.c.l.b16 %v1737
  %v1980 = vunpack.c.h.b16 %v1737
  %v1981 = vunpack.c.l.b16 %v1738
  %v1982 = vunpack.c.h.b16 %v1738
  %v1983 = vunpack.c.l.b16 %v1739
  %v1984 = vunpack.c.h.b16 %v1739
  %v1985 = vunpack.c.l.b16 %v1740
  %v1986 = vunpack.c.h.b16 %v1740
  %v1987 = vunpack.c.l.b16 %v1741
  %v1988 = vunpack.c.h.b16 %v1741
  %v1989 = vunpack.c.l.b16 %v1742
  %v1990 = vunpack.c.h.b16 %v1742
  %v1991 = vunpack.c.l.b16 %v1743
  %v1992 = vunpack.c.h.b16 %v1743
  %v1993 = vunpack.c.l.b16 %v1744
  %v1994 = vunpack.c.h.b16 %v1744
  %v1995 = vunpack.c.l.b16 %v1745
  %v1996 = vunpack.c.h.b16 %v1745
  %v1997 = vunpack.c.l.b16 %v1746
  %v1998 = vunpack.c.h.b16 %v1746
  %v1999 = vunpack.c.l.b16 %v1747
  %v2000 = vunpack.c.h.b16 %v1747
  %v2001 = vunpack.c.l.b16 %v1748
  %v2002 = vunpack.c.h.b16 %v1748
  %v2003 = vunpack.c.l.b16 %v1749
  %v2004 = vunpack.c.h.b16 %v1749
  %v2005 = vunpack.c.l.b16 %v1750
  %v2006 = vunpack.c.h.b16 %v1750
  %v2007 = vunpack.c.l.b16 %v1751
  %v2008 = vunpack.c.h.b16 %v1751
  %v2009 = vunpack.c.l.b16 %v1752
  %v2010 = vunpack.c.h.b16 %v1752
  %v2011 = vpack.c.b16 %v1839, %v1839
  %v2012 = vpack.c.b16 %v1840, %v1840
  %v2013 = vpack.c.b16 %v1841, %v1841
  %v2014 = vpack.c.b16 %v1842, %v1842
  %v2015 = vpack.c.b16 %v1843, %v1843
  %v2016 = vpack.c.b16 %v1844, %v1844
  %v2017 = vpack.c.b16 %v1845, %v1845
  %v2018 = vpack.c.b16 %v1846, %v1846
  %v2019 = vpack.c.b16 %v1847, %v1847
  %v2020 = vpack.c.b16 %v1848, %v1848
  %v2021 = vpack.c.b16 %v1849, %v1849
  %v2022 = vpack.c.b16 %v1850, %v1850
  %v2023 = vpack.c.b16 %v1851, %v1851
  %v2024 = vpack.c.b16 %v1852, %v1852
  %v2025 = vpack.c.b16 %v1853, %v1853
  %v2026 = vpack.c.b16 %v1854, %v1854
  %v2027 = vpack.c.b16 %v1855, %v1855
  %v2028 = vpack.c.b16 %v1856, %v1856
  %v2029 = vpack.c.b16 %v1857, %v1857
  %v2030 = vpack.c.b16 %v1858, %v1858
  %v2031 = vpack.c.b16 %v1859, %v1859
  %v2032 = vpack.c.b16 %v1860, %v1860
  %v2033 = vpack.c.b16 %v1861, %v1861
  %v2034 = vpack.c.b16 %v1862, %v1862
  %v2035 = vpack.c.b16 %v1863, %v1863
  %v2036 = vpack.c.b16 %v1864, %v1864
  %v2037 = vpack.c.b16 %v1865, %v1865
  %v2038 = vpack.c.b16 %v1866, %v1866
  %v2039 = vpack.c.b16 %v1867, %v1867
  %v2040 = vpack.c.b16 %v1868, %v1868
  %v2041 = vpack.c.b16 %v1869, %v1869
  %v2042 = vpack.c.b16 %v1870, %v1870
  %v2043 = vpack.c.b16 %v1871, %v1871
  %v2044 = vpack.c.b16 %v1872, %v1872
  %v2045 = vpack.c.b16 %v1873, %v1873
  %v2046 = vpack.c.b16 %v1874, %v1874
  %v2047 = vpack.c.b16 %v1875, %v1875
  %v2048 = vpack.c.b16 %v1876, %v1876
  %v2049 = vpack.c.b16 %v1877, %v1877
  %v2050 = vpack.c.b16 %v1878, %v1878
  %v2051 = vpack.c.b16 %v1879, %v1879
  %v2052 = vpack.c.b16 %v1880, %v1880
  %v2053 = vpack.c.b16 %v1881, %v1881
  %v2054 = vpack.c.b16 %v1882, %v1882
  %v2055 = vpack.c.b16 %v1883, %v1883
  %v2056 = vpack.c.b16 %v1884, %v1884
  %v2057 = vpack.c.b16 %v1885, %v1885
  %v2058 = vpack.c.b16 %v1886, %v1886
  %v2059 = vpack.c.b16 %v1887, %v1887
  %v2060 = vpack.c.b16 %v1888, %v1888
  %v2061 = vpack.c.b16 %v1889, %v1889
  %v2062 = vpack.c.b16 %v1890, %v1890
  %v2063 = vpack.c.b16 %v1891, %v1891
  %v2064 = vpack.c.b16 %v1892, %v1892
  %v2065 = vpack.c.b16 %v1893, %v1893
  %v2066 = vpack.c.b16 %v1894, %v1894
  %v2067 = vpack.c.b16 %v1895, %v1895
  %v2068 = vpack.c.b16 %v1896, %v1896
  %v2069 = vpack.c.b16 %v1897, %v1897
  %v2070 = vpack.c.b16 %v1898, %v1898
  %v2071 = vpack.c.b16 %v1899, %v1899
  %v2072 = vpack.c.b16 %v1900, %v1900
  %v2073 = vpack.c.b16 %v1901, %v1901
  %v2074 = vpack.c.b16 %v1902, %v1902
  %v2075 = vpack.c.b16 %v1903, %v1903
  %v2076 = vpack.c.b16 %v1904, %v1904
  %v2077 = vpack.c.b16 %v1905, %v1905
  %v2078 = vpack.c.b16 %v1906, %v1906
  %v2079 = vpack.c.b16 %v1907, %v1907
  %v2080 = vpack.c.b16 %v1908, %v1908
  %v2081 = vpack.c.b16 %v1909, %v1909
  %v2082 = vpack.c.b16 %v1910, %v1910
  %v2083 = vpack.c.b16 %v1911, %v1911
  %v2084 = vpack.c.b16 %v1912, %v1912
  %v2085 = vpack.c.b16 %v1913, %v1913
  %v2086 = vpack.c.b16 %v1914, %v1914
  %v2087 = vpack.c.b16 %v1915, %v1915
  %v2088 = vpack.c.b16 %v1916, %v1916
  %v2089 = vpack.c.b16 %v1917, %v1917
  %v2090 = vpack.c.b16 %v1918, %v1918
  %v2091 = vpack.c.b16 %v1919, %v1919
  %v2092 = vpack.c.b16 %v1920, %v1920
  %v2093 = vpack.c.b16 %v1921, %v1921
  %v2094 = vpack.c.b16 %v1922, %v1922
  %v2095 = vpack.c.b16 %v1923, %v1923
  %v2096 = vpack.c.b16 %v1924, %v1924
  %v2097 = vpack.c.b16 %v1925, %v1925
  %v2098 = vpack.c.b16 %v1926, %v1926
  %v2099 = vpack.c.b16 %v1927, %v1927
  %v2100 = vpack.c.b16 %v1928, %v1928
  %v2101 = vpack.c.b16 %v1929, %v1929
  %v2102 = vpack.c.b16 %v1930, %v1930
  %v2103 = vpack.c.b16 %v1931, %v1931
  %v2104 = vpack.c.b16 %v1932, %v1932
  %v2105 = vpack.c.b16 %v1933, %v1933
  %v2106 = vpack.c.b16 %v1934, %v1934
  %v2107 = vpack.c.b16 %v1935, %v1935
  %v2108 = vpack.c.b16 %v1936, %v1936
  %v2109 = vpack.c.b16 %v1937, %v1937
  %v2110 = vpack.c.b16 %v1938, %v1938
  %v2111 = vpack.c.b16 %v1939, %v1939
  %v2112 = vpack.c.b16 %v1940, %v1940
  %v2113 = vpack.c.b16 %v1941, %v1941
  %v2114 = vpack.c.b16 %v1942, %v1942
  %v2115 = vpack.c.b16 %v1943, %v1943
  %v2116 = vpack.c.b16 %v1944, %v1944
  %v2117 = vpack.c.b16 %v1945, %v1945
  %v2118 = vpack.c.b16 %v1946, %v1946
  %v2119 = vpack.c.b16 %v1947, %v1947
  %v2120 = vpack.c.b16 %v1948, %v1948
  %v2121 = vpack.c.b16 %v1949, %v1949
  %v2122 = vpack.c.b16 %v1950, %v1950
  %v2123 = vpack.c.b16 %v1951, %v1951
  %v2124 = vpack.c.b16 %v1952, %v1952
  %v2125 = vpack.c.b16 %v1953, %v1953
  %v2126 = vpack.c.b16 %v1954, %v1954
  %v2127 = vpack.c.b16 %v1955, %v1955
  %v2128 = vpack.c.b16 %v1956, %v1956
  %v2129 = vpack.c.b16 %v1957, %v1957
  %v2130 = vpack.c.b16 %v1958, %v1958
  %v2131 = vpack.c.b16 %v1959, %v1959
  %v2132 = vpack.c.b16 %v1960, %v1960
  %v2133 = vpack.c.b16 %v1961, %v1961
  %v2134 = vpack.c.b16 %v1962, %v1962
  %v2135 = vpack.c.b16 %v1963, %v1963
  %v2136 = vpack.c.b16 %v1964, %v1964
  %v2137 = vpack.c.b16 %v1965, %v1965
  %v2138 = vpack.c.b16 %v1966, %v1966
  %v2139 = vpack.c.b16 %v1967, %v1967
  %v2140 = vpack.c.b16 %v1968, %v1968
  %v2141 = vpack.c.b16 %v1969, %v1969
  %v2142 = vpack.c.b16 %v1970, %v1970
  %v2143 = vpack.c.b16 %v1971, %v1971
  %v2144 = vpack.c.b16 %v1972, %v1972
  %v2145 = vpack.c.b16 %v1973, %v1973
  %v2146 = vpack.c.b16 %v1974, %v1974
  %v2147 = vpack.c.b16 %v1975, %v1975
  %v2148 = vpack.c.b16 %v1976, %v1976
  %v2149 = vpack.c.b16 %v1977, %v1977
  %v2150 = vpack.c.b16 %v1978, %v1978
  %v2151 = vpack.c.b16 %v1979, %v1979
  %v2152 = vpack.c.b16 %v1980, %v1980
  %v2153 = vpack.c.b16 %v1981, %v1981
  %v2154 = vpack.c.b16 %v1982, %v1982
  %v2155 = vpack.c.b16 %v1983, %v1983
  %v2156 = vpack.c.b16 %v1984, %v1984
  %v2157 = vpack.c.b16 %v1985, %v1985
  %v2158 = vpack.c.b16 %v1986, %v1986
  %v2159 = vpack.c.b16 %v1987, %v1987
  %v2160 = vpack.c.b16 %v1988, %v1988
  %v2161 = vpack.c.b16 %v1989, %v1989
  %v2162 = vpack.c.b16 %v1990, %v1990
  %v2163 = vpack.c.b16 %v1991, %v1991
  %v2164 = vpack.c.b16 %v1992, %v1992
  %v2165 = vpack.c.b16 %v1993, %v1993
  %v2166 = vpack.c.b16 %v1994, %v1994
  %v2167 = vpack.c.b16 %v1995, %v1995
  %v2168 = vpack.c.b16 %v1996, %v1996
  %v2169 = vpack.c.b16 %v1997, %v1997
  %v2170 = vpack.c.b16 %v1998, %v1998
  %v2171 = vpack.c.b16 %v1999, %v1999
  %v2172 = vpack.c.b16 %v2000, %v2000
  %v2173 = vpack.c.b16 %v2001, %v2001
  %v2174 = vpack.c.b16 %v2002, %v2002
  %v2175 = vpack.c.b16 %v2003, %v2003
  %v2176 = vpack.c.b16 %v2004, %v2004
  %v2177 = vpack.c.b16 %v2005, %v2005
  %v2178 = vpack.c.b16 %v2006, %v2006
  %v2179 = vpack.c.b16 %v2007, %v2007
  %v2180 = vpack.c.b16 %v2008, %v2008
  %v2181 = vpack.c.b16 %v2009, %v2009
  %v2182 = vpack.c.b16 %v2010, %v2010
  %2355 = vst [vmem:[%s3] sm:$0xf] %v2011
  %2356 = vst [vmem:[%s3 + $0x4] sm:$0xf] %v2012
  %2357 = vst [vmem:[%s3 + $0x8] sm:$0xf] %v2013
  %2358 = vst [vmem:[%s3 + $0xc] sm:$0xf] %v2014
  %2359 = vst [vmem:[%s3 + $0x10] sm:$0xf] %v2015
  %2360 = vst [vmem:[%s3 + $0x14] sm:$0xf] %v2016
  %2361 = vst [vmem:[%s3 + $0x18] sm:$0xf] %v2017
  %2362 = vst [vmem:[%s3 + $0x1c] sm:$0xf] %v2018
  %2363 = vst [vmem:[%s3 + $0x20] sm:$0xf] %v2019
  %2364 = vst [vmem:[%s3 + $0x24] sm:$0xf] %v2020
  %2365 = vst [vmem:[%s3 + $0x28] sm:$0xf] %v2021
  %2366 = vst [vmem:[%s3 + $0x2c] sm:$0xf] %v2022
  %2367 = vst [vmem:[%s3 + $0x30] sm:$0xf] %v2023
  %2368 = vst [vmem:[%s3 + $0x34] sm:$0xf] %v2024
  %2369 = vst [vmem:[%s3 + $0x38] sm:$0xf] %v2025
  %2370 = vst [vmem:[%s3 + $0x3c] sm:$0xf] %v2026
  %2371 = vst [vmem:[%s3 + $0x40] sm:$0xf] %v2027
  %2372 = vst [vmem:[%s3 + $0x44] sm:$0xf] %v2028
  %2373 = vst [vmem:[%s3 + $0x48] sm:$0xf] %v2029
  %2374 = vst [vmem:[%s3 + $0x4c] sm:$0xf] %v2030
  %2375 = vst [vmem:[%s3 + $0x50] sm:$0xf] %v2031
  %2376 = vst [vmem:[%s3 + $0x54] sm:$0xf] %v2032
  %2377 = vst [vmem:[%s3 + $0x58] sm:$0xf] %v2033
  %2378 = vst [vmem:[%s3 + $0x5c] sm:$0xf] %v2034
  %2379 = vst [vmem:[%s3 + $0x60] sm:$0xf] %v2035
  %2380 = vst [vmem:[%s3 + $0x64] sm:$0xf] %v2036
  %2381 = vst [vmem:[%s3 + $0x68] sm:$0xf] %v2037
  %2382 = vst [vmem:[%s3 + $0x6c] sm:$0xf] %v2038
  %2383 = vst [vmem:[%s3 + $0x70] sm:$0xf] %v2039
  %2384 = vst [vmem:[%s3 + $0x74] sm:$0xf] %v2040
  %2385 = vst [vmem:[%s3 + $0x78] sm:$0xf] %v2041
  %2386 = vst [vmem:[%s3 + $0x7c] sm:$0xf] %v2042
  %2387 = vst [vmem:[%s3 + $0x80] sm:$0xf] %v2043
  %2388 = vst [vmem:[%s3 + $0x84] sm:$0xf] %v2044
  %2389 = vst [vmem:[%s3 + $0x88] sm:$0xf] %v2045
  %2390 = vst [vmem:[%s3 + $0x8c] sm:$0xf] %v2046
  %2391 = vst [vmem:[%s3 + $0x90] sm:$0xf] %v2047
  %2392 = vst [vmem:[%s3 + $0x94] sm:$0xf] %v2048
  %2393 = vst [vmem:[%s3 + $0x98] sm:$0xf] %v2049
  %2394 = vst [vmem:[%s3 + $0x9c] sm:$0xf] %v2050
  %2395 = vst [vmem:[%s3 + $0xa0] sm:$0xf] %v2051
  %2396 = vst [vmem:[%s3 + $0xa4] sm:$0xf] %v2052
  %2397 = vst [vmem:[%s3 + $0xa8] sm:$0xf] %v2053
  %2398 = vst [vmem:[%s3 + $0xac] sm:$0xf] %v2054
  %2399 = vst [vmem:[%s3 + $0xb0] sm:$0xf] %v2055
  %2400 = vst [vmem:[%s3 + $0xb4] sm:$0xf] %v2056
  %2401 = vst [vmem:[%s3 + $0xb8] sm:$0xf] %v2057
  %2402 = vst [vmem:[%s3 + $0xbc] sm:$0xf] %v2058
  %2403 = vst [vmem:[%s3 + $0xc0] sm:$0xf] %v2059
  %2404 = vst [vmem:[%s3 + $0xc4] sm:$0xf] %v2060
  %2405 = vst [vmem:[%s3 + $0xc8] sm:$0xf] %v2061
  %2406 = vst [vmem:[%s3 + $0xcc] sm:$0xf] %v2062
  %2407 = vst [vmem:[%s3 + $0xd0] sm:$0xf] %v2063
  %2408 = vst [vmem:[%s3 + $0xd4] sm:$0xf] %v2064
  %2409 = vst [vmem:[%s3 + $0xd8] sm:$0xf] %v2065
  %2410 = vst [vmem:[%s3 + $0xdc] sm:$0xf] %v2066
  %2411 = vst [vmem:[%s3 + $0xe0] sm:$0xf] %v2067
  %2412 = vst [vmem:[%s3 + $0xe4] sm:$0xf] %v2068
  %2413 = vst [vmem:[%s3 + $0xe8] sm:$0xf] %v2069
  %2414 = vst [vmem:[%s3 + $0xec] sm:$0xf] %v2070
  %2415 = vst [vmem:[%s3 + $0xf0] sm:$0xf] %v2071
  %2416 = vst [vmem:[%s3 + $0xf4] sm:$0xf] %v2072
  %2417 = vst [vmem:[%s3 + $0xf8] sm:$0xf] %v2073
  %2418 = vst [vmem:[%s3 + $0xfc] sm:$0xf] %v2074
  %2419 = vst [vmem:[%s3 + $0x100] sm:$0xf] %v2075
  %2420 = vst [vmem:[%s3 + $0x104] sm:$0xf] %v2076
  %2421 = vst [vmem:[%s3 + $0x108] sm:$0xf] %v2077
  %2422 = vst [vmem:[%s3 + $0x10c] sm:$0xf] %v2078
  %2423 = vst [vmem:[%s3 + $0x110] sm:$0xf] %v2079
  %2424 = vst [vmem:[%s3 + $0x114] sm:$0xf] %v2080
  %2425 = vst [vmem:[%s3 + $0x118] sm:$0xf] %v2081
  %2426 = vst [vmem:[%s3 + $0x11c] sm:$0xf] %v2082
  %2427 = vst [vmem:[%s3 + $0x120] sm:$0xf] %v2083
  %2428 = vst [vmem:[%s3 + $0x124] sm:$0xf] %v2084
  %2429 = vst [vmem:[%s3 + $0x128] sm:$0xf] %v2085
  %2430 = vst [vmem:[%s3 + $0x12c] sm:$0xf] %v2086
  %2431 = vst [vmem:[%s3 + $0x130] sm:$0xf] %v2087
  %2432 = vst [vmem:[%s3 + $0x134] sm:$0xf] %v2088
  %2433 = vst [vmem:[%s3 + $0x138] sm:$0xf] %v2089
  %2434 = vst [vmem:[%s3 + $0x13c] sm:$0xf] %v2090
  %2435 = vst [vmem:[%s3 + $0x140] sm:$0xf] %v2091
  %2436 = vst [vmem:[%s3 + $0x144] sm:$0xf] %v2092
  %2437 = vst [vmem:[%s3 + $0x148] sm:$0xf] %v2093
  %2438 = vst [vmem:[%s3 + $0x14c] sm:$0xf] %v2094
  %2439 = vst [vmem:[%s3 + $0x150] sm:$0xf] %v2095
  %2440 = vst [vmem:[%s3 + $0x154] sm:$0xf] %v2096
  %2441 = vst [vmem:[%s3 + $0x158] sm:$0xf] %v2097
  %2442 = vst [vmem:[%s3 + $0x15c] sm:$0xf] %v2098
  %2443 = vst [vmem:[%s3 + $0x160] sm:$0xf] %v2099
  %2444 = vst [vmem:[%s3 + $0x164] sm:$0xf] %v2100
  %2445 = vst [vmem:[%s3 + $0x168] sm:$0xf] %v2101
  %2446 = vst [vmem:[%s3 + $0x16c] sm:$0xf] %v2102
  %2447 = vst [vmem:[%s3 + $0x170] sm:$0xf] %v2103
  %2448 = vst [vmem:[%s3 + $0x174] sm:$0xf] %v2104
  %2449 = vst [vmem:[%s3 + $0x178] sm:$0xf] %v2105
  %2450 = vst [vmem:[%s3 + $0x17c] sm:$0xf] %v2106
  %2451 = vst [vmem:[%s3 + $0x180] sm:$0xf] %v2107
  %2452 = vst [vmem:[%s3 + $0x184] sm:$0xf] %v2108
  %2453 = vst [vmem:[%s3 + $0x188] sm:$0xf] %v2109
  %2454 = vst [vmem:[%s3 + $0x18c] sm:$0xf] %v2110
  %2455 = vst [vmem:[%s3 + $0x190] sm:$0xf] %v2111
  %2456 = vst [vmem:[%s3 + $0x194] sm:$0xf] %v2112
  %2457 = vst [vmem:[%s3 + $0x198] sm:$0xf] %v2113
  %2458 = vst [vmem:[%s3 + $0x19c] sm:$0xf] %v2114
  %2459 = vst [vmem:[%s3 + $0x1a0] sm:$0xf] %v2115
  %2460 = vst [vmem:[%s3 + $0x1a4] sm:$0xf] %v2116
  %2461 = vst [vmem:[%s3 + $0x1a8] sm:$0xf] %v2117
  %2462 = vst [vmem:[%s3 + $0x1ac] sm:$0xf] %v2118
  %2463 = vst [vmem:[%s3 + $0x1b0] sm:$0xf] %v2119
  %2464 = vst [vmem:[%s3 + $0x1b4] sm:$0xf] %v2120
  %2465 = vst [vmem:[%s3 + $0x1b8] sm:$0xf] %v2121
  %2466 = vst [vmem:[%s3 + $0x1bc] sm:$0xf] %v2122
  %2467 = vst [vmem:[%s3 + $0x1c0] sm:$0xf] %v2123
  %2468 = vst [vmem:[%s3 + $0x1c4] sm:$0xf] %v2124
  %2469 = vst [vmem:[%s3 + $0x1c8] sm:$0xf] %v2125
  %2470 = vst [vmem:[%s3 + $0x1cc] sm:$0xf] %v2126
  %2471 = vst [vmem:[%s3 + $0x1d0] sm:$0xf] %v2127
  %2472 = vst [vmem:[%s3 + $0x1d4] sm:$0xf] %v2128
  %2473 = vst [vmem:[%s3 + $0x1d8] sm:$0xf] %v2129
  %2474 = vst [vmem:[%s3 + $0x1dc] sm:$0xf] %v2130
  %2475 = vst [vmem:[%s3 + $0x1e0] sm:$0xf] %v2131
  %2476 = vst [vmem:[%s3 + $0x1e4] sm:$0xf] %v2132
  %2477 = vst [vmem:[%s3 + $0x1e8] sm:$0xf] %v2133
  %2478 = vst [vmem:[%s3 + $0x1ec] sm:$0xf] %v2134
  %2479 = vst [vmem:[%s3 + $0x1f0] sm:$0xf] %v2135
  %2480 = vst [vmem:[%s3 + $0x1f4] sm:$0xf] %v2136
  %2481 = vst [vmem:[%s3 + $0x1f8] sm:$0xf] %v2137
  %2482 = vst [vmem:[%s3 + $0x1fc] sm:$0xf] %v2138
  %2483 = vst [vmem:[%s3 + $0x200] sm:$0xf] %v2139
  %2484 = vst [vmem:[%s3 + $0x204] sm:$0xf] %v2140
  %2485 = vst [vmem:[%s3 + $0x208] sm:$0xf] %v2141
  %2486 = vst [vmem:[%s3 + $0x20c] sm:$0xf] %v2142
  %2487 = vst [vmem:[%s3 + $0x210] sm:$0xf] %v2143
  %2488 = vst [vmem:[%s3 + $0x214] sm:$0xf] %v2144
  %2489 = vst [vmem:[%s3 + $0x218] sm:$0xf] %v2145
  %2490 = vst [vmem:[%s3 + $0x21c] sm:$0xf] %v2146
  %2491 = vst [vmem:[%s3 + $0x220] sm:$0xf] %v2147
  %2492 = vst [vmem:[%s3 + $0x224] sm:$0xf] %v2148
  %2493 = vst [vmem:[%s3 + $0x228] sm:$0xf] %v2149
  %2494 = vst [vmem:[%s3 + $0x22c] sm:$0xf] %v2150
  %2495 = vst [vmem:[%s3 + $0x230] sm:$0xf] %v2151
  %2496 = vst [vmem:[%s3 + $0x234] sm:$0xf] %v2152
  %2497 = vst [vmem:[%s3 + $0x238] sm:$0xf] %v2153
  %2498 = vst [vmem:[%s3 + $0x23c] sm:$0xf] %v2154
  %2499 = vst [vmem:[%s3 + $0x240] sm:$0xf] %v2155
  %2500 = vst [vmem:[%s3 + $0x244] sm:$0xf] %v2156
  %2501 = vst [vmem:[%s3 + $0x248] sm:$0xf] %v2157
  %2502 = vst [vmem:[%s3 + $0x24c] sm:$0xf] %v2158
  %2503 = vst [vmem:[%s3 + $0x250] sm:$0xf] %v2159
  %2504 = vst [vmem:[%s3 + $0x254] sm:$0xf] %v2160
  %2505 = vst [vmem:[%s3 + $0x258] sm:$0xf] %v2161
  %2506 = vst [vmem:[%s3 + $0x25c] sm:$0xf] %v2162
  %2507 = vst [vmem:[%s3 + $0x260] sm:$0xf] %v2163
  %2508 = vst [vmem:[%s3 + $0x264] sm:$0xf] %v2164
  %2509 = vst [vmem:[%s3 + $0x268] sm:$0xf] %v2165
  %2510 = vst [vmem:[%s3 + $0x26c] sm:$0xf] %v2166
  %2511 = vst [vmem:[%s3 + $0x270] sm:$0xf] %v2167
  %2512 = vst [vmem:[%s3 + $0x274] sm:$0xf] %v2168
  %2513 = vst [vmem:[%s3 + $0x278] sm:$0xf] %v2169
  %2514 = vst [vmem:[%s3 + $0x27c] sm:$0xf] %v2170
  %2515 = vst [vmem:[%s3 + $0x280] sm:$0xf] %v2171
  %2516 = vst [vmem:[%s3 + $0x284] sm:$0xf] %v2172
  %2517 = vst [vmem:[%s3 + $0x288] sm:$0xf] %v2173
  %2518 = vst [vmem:[%s3 + $0x28c] sm:$0xf] %v2174
  %2519 = vst [vmem:[%s3 + $0x290] sm:$0xf] %v2175
  %2520 = vst [vmem:[%s3 + $0x294] sm:$0xf] %v2176
  %2521 = vst [vmem:[%s3 + $0x298] sm:$0xf] %v2177
  %2522 = vst [vmem:[%s3 + $0x29c] sm:$0xf] %v2178
  %2523 = vst [vmem:[%s3 + $0x2a0] sm:$0xf] %v2179
  %2524 = vst [vmem:[%s3 + $0x2a4] sm:$0xf] %v2180
  %2525 = vst [vmem:[%s3 + $0x2a8] sm:$0xf] %v2181
  %2526 = vst [vmem:[%s3 + $0x2ac] sm:$0xf] %v2182
  // Predicated region
  $region14: #{fused_matmul.1} parent=0 // pred_check
    _
  $region15: #{fused_matmul.1} parent=0 // pred_check_branch
    %2528 = sbr.rel (0) target = $region17
  $region16: #{fused_matmul.1} parent=0 // pred_region
    _
  $region17: #{fused_matmul.1} parent=0 // pred_fallthru
    _
  // Predicated region
  $region18: #{fused_matmul.1} parent=0 // pred_check
    _
  $region19: #{fused_matmul.1} parent=0 // pred_check_branch
    %2530 = sbr.rel (0) target = $region21
  $region20: #{fused_matmul.1} parent=0 // pred_region
    _
  $region21: #{fused_matmul.1} parent=0 // pred_fallthru
    _

</llo_original>
